<compile_context>
chip_gen: v5e
topology: v5e:2x2
jax: 0.10.0
libtpu: 0.0.40
codegen_flags: <defaults>
</compile_context>

<pallas_src>
import numpy as np

import jax
import jax.numpy as jnp
from jax.experimental import pallas as pl
from jax.experimental.pallas import tpu as pltpu

EPS = 1e-5                      # nn.BatchNorm2d default eps
KK = 5                          # 5x5 conv, stride 1, pad 2
H = W = 16                      # input spatial size
C1, C2, NCLS = 16, 32, 10
HP1, WP1 = H + 4, W + 4         # padded stage-1 input (20, 20)
P1H, P1W = H // 2, W // 2       # after pool1 (8, 8)
HP2, WP2 = P1H + 4, P1W + 4     # padded stage-2 input (12, 12)
P2H, P2W = P1H // 2, P1W // 2   # after pool2 (4, 4)
P1H2 = P1H // 2                 # stage-1 output-row-parity split (4)
K1 = KK * WP1                   # conv1 contraction depth (100)
LANE2 = 2 * 128                 # stage-2 folded lanes per tap (192 used, padded to 256)
K2 = KK * LANE2                 # conv2 contraction depth (1280)


def _vmem():
    return pl.BlockSpec(memory_space=pltpu.MemorySpace.VMEM)


# --------------------------------------------------------------------------
# in-kernel helper: training-mode BatchNorm (batch stats) + ReLU + 2x2 maxpool
# --------------------------------------------------------------------------
def _bn_relu_pool(conv_ph, gamma, beta, *, cout, n_pixels):
    """conv_ph: two (M, 256) f32 arrays (one per output-row parity); lane layout
    pw*128 + wb*cout + c.  Returns pooled (M, 128) f32, lane layout wb*cout + c."""
    lanes = conv_ph[0].shape[1]                  # 256
    blocks = lanes // cout                       # lane blocks per channel
    tot = jnp.zeros((1, lanes), jnp.float32)
    tot2 = jnp.zeros((1, lanes), jnp.float32)
    for a in conv_ph:
        tot = tot + jnp.sum(a, axis=0, keepdims=True)
        tot2 = tot2 + jnp.sum(a * a, axis=0, keepdims=True)
    s = jnp.zeros((1, cout), jnp.float32)
    s2 = jnp.zeros((1, cout), jnp.float32)
    for k in range(blocks):                      # fold lane blocks -> per channel
        s = s + tot[:, k * cout:(k + 1) * cout]
        s2 = s2 + tot2[:, k * cout:(k + 1) * cout]
    inv = 1.0 / float(n_pixels)
    mean = s * inv
    var = jnp.maximum(s2 * inv - mean * mean, 0.0)       # biased var (PyTorch train)
    scale_c = gamma * jax.lax.rsqrt(var + EPS)           # (1, cout)
    shift_c = beta - mean * scale_c
    scale = jnp.concatenate([scale_c] * blocks, axis=1)  # broadcast to lane layout
    shift = jnp.concatenate([shift_c] * blocks, axis=1)
    pooled = None
    for a in conv_ph:
        y = jnp.maximum(a * scale + shift, 0.0)                      # BN affine + ReLU
        half = jnp.maximum(y[:, :lanes // 2], y[:, lanes // 2:])     # pool col parity
        pooled = half if pooled is None else jnp.maximum(pooled, half)  # pool row parity
    return pooled


# --------------------------------------------------------------------------
# the fused kernel
# --------------------------------------------------------------------------
def cnn_kernel(l1_ref, w1_ref, g1_ref, b1_ref, pmat_ref, w2_ref, g2_ref, b2_ref,
               wfc_ref, bfc_ref, out_ref):
    n = out_ref.shape[0]

    # ---- conv1: one (8N, K1) @ (K1, 256) matmul per output-row parity ----
    w1 = w1_ref[...]
    conv1 = [jnp.dot(l1_ref[ph], w1, preferred_element_type=jnp.float32)
             for ph in range(2)]                                      # 2 x (8N, 256)

    # ---- bn1 + relu + 2x2 maxpool (pure lane / array max, no strided slices) ----
    pooled1 = _bn_relu_pool(conv1, g1_ref[...], b1_ref[...],
                            cout=C1, n_pixels=n * H * W)              # (8N, 128)
    # rows ordered (row parity q1, sample, row//2); lanes = j*C1 + c.

    # ---- stage-2 width pad + column-parity fold: one matmul vs a 0/1 matrix ----
    xq2 = jnp.dot(pooled1.astype(jnp.bfloat16), pmat_ref[...],
                  preferred_element_type=jnp.float32)                 # (8N, 256)

    # ---- height pad per (row parity, sample): 6 rows = [0, 4 data rows, 0] ----
    zrow = jnp.zeros((1, LANE2), jnp.float32)
    hp = [[jnp.concatenate(
              [zrow, xq2[(qh * n + b) * P1H2:(qh * n + b + 1) * P1H2, :], zrow],
              axis=0)
           for b in range(n)] for qh in range(2)]                     # hp[qh][b]: (6, 256)

    # ---- conv2: assemble the ki-folded LHS with static slices, 2 matmuls ----
    w2 = w2_ref[...]
    conv2 = []
    for ph in range(2):
        kparts = []
        for ki in range(KK):
            qh, dh = (ph + ki) % 2, (ph + ki) // 2
            kparts.append(jnp.concatenate([hp[qh][b][dh:dh + P2H, :]
                                           for b in range(n)], axis=0))    # (4N, 256)
        l2 = jnp.concatenate(kparts, axis=1).astype(jnp.bfloat16)          # (4N, K2)
        conv2.append(jnp.dot(l2, w2, preferred_element_type=jnp.float32))  # (4N, 256)

    # ---- bn2 + relu + pool ----
    pooled2 = _bn_relu_pool(conv2, g2_ref[...], b2_ref[...],
                            cout=C2, n_pixels=n * P1H * P1W)          # (4N, 128)

    # ---- global average pool + fc (one batched matmul, one store) ----
    gsum = jnp.zeros((n * P2H, C2), jnp.float32)
    for k in range(P2W):                                              # fold width blocks
        gsum = gsum + pooled2[:, k * C2:(k + 1) * C2]
    gap = jnp.concatenate(
        [jnp.sum(gsum[b * P2H:(b + 1) * P2H, :], axis=0, keepdims=True)
         for b in range(n)], axis=0) * (1.0 / float(P2H * P2W))       # (N, C2)
    out_ref[...] = (jnp.dot(gap.astype(jnp.bfloat16), wfc_ref[...],
                            preferred_element_type=jnp.float32) + bfc_ref[...])


# --------------------------------------------------------------------------
# host-side glue: stage-1 LHS construction (tiny XLA ops) and param prep
# --------------------------------------------------------------------------
def _build_l1(x):
    """x: (N, 1, H, W) f32 -> stage-1 ki-folded LHS (2, 8N, K1) bf16.
    Row m = q1*(4N) + sample*4 + i2 is conv-output row ho = 2*(2*i2+q1)+ph;
    lane k = ki*WP1 + qw*(WP1//2) + j' is padded-input pixel
    (row 4*i2 + 2*q1 + ph + ki, col 2*j' + qw)."""
    n = x.shape[0]
    xp = jnp.pad(x[:, 0], ((0, 0), (2, 2), (2, 2)))                  # (N, 20, 20)
    xw = xp.reshape(n, HP1, WP1 // 2, 2)                             # (..., j', qw)
    xw = jnp.transpose(xw, (0, 1, 3, 2)).reshape(n, HP1, WP1)        # lane = qw*10 + j'
    phs = []
    for ph in range(2):
        qs = []
        for q1 in range(2):
            ridx = (4 * np.arange(P1H2)[:, None] + 2 * q1 + ph
                    + np.arange(KK)[None, :]).reshape(-1)            # (4*5,)
            g = jnp.take(xw, jnp.asarray(ridx, dtype=jnp.int32), axis=1)   # (N, 20, 20)
            qs.append(g.reshape(n, P1H2, K1))                        # lane = ki*20 + ...
        phs.append(jnp.stack(qs, axis=0).reshape(2 * n * P1H2, K1))
    return jnp.stack(phs, axis=0).astype(jnp.bfloat16)               # (2, 8N, K1)


def _banded_weights(w_kkio, out_w, qw_stride, ki_stride):
    """w_kkio: (5,5,cin,cout).  Returns the ki-folded, column-parity-merged banded
    RHS of shape (KK*ki_stride, 2*out_w*cout):
      row = ki*ki_stride + qw*qw_stride + j'*cin + c_in
      col = pw*(out_w*cout) + wb*cout + c_out."""
    _, _, cin, cout = w_kkio.shape
    out = np.zeros((KK * ki_stride, 2 * out_w * cout), np.float32)
    for ki in range(KK):
        for pw in range(2):
            for kj in range(KK):
                qw, dw = (pw + kj) % 2, (pw + kj) // 2
                for wb in range(out_w):
                    r0 = ki * ki_stride + qw * qw_stride + (wb + dw) * cin
                    c0 = pw * (out_w * cout) + wb * cout
                    out[r0:r0 + cin, c0:c0 + cout] += w_kkio[ki, kj]
    return out


def _fold_matrix():
    """(128, 256) 0/1 matrix mapping pooled1 lanes (j*C1+c) to stage-2
    width-padded, column-parity-folded lanes (qw*128 + j'*C1 + c), j' in [0,6)."""
    p = np.zeros((P1W * C1, LANE2), np.float32)
    for qw in range(2):
        for jp in range(WP2 // 2):
            j = 2 * jp + qw - 2
            if 0 <= j < P1W:
                p[j * C1:(j + 1) * C1, qw * 128 + jp * C1:qw * 128 + (jp + 1) * C1] = \
                    np.eye(C1, dtype=np.float32)
    return p


def init_params(key):
    ks = jax.random.split(key, 4)
    w1 = 0.1 * jax.random.normal(ks[0], (C1, 1, KK, KK), jnp.float32)   # PyTorch OIHW
    w2 = 0.05 * jax.random.normal(ks[1], (C2, C1, KK, KK), jnp.float32)
    wfc = 0.1 * jax.random.normal(ks[2], (NCLS, C2), jnp.float32)
    bfc = 0.1 * jax.random.normal(ks[3], (NCLS,), jnp.float32)
    # NOTE: conv biases are omitted on purpose: training-mode BatchNorm subtracts
    # the batch mean, so per-channel conv biases cancel exactly.
    w1_kkio = np.transpose(np.asarray(w1), (2, 3, 1, 0))    # (5,5,1,C1)
    w2_kkio = np.transpose(np.asarray(w2), (2, 3, 1, 0))    # (5,5,C1,C2)
    params = {
        "w1": jnp.asarray(_banded_weights(w1_kkio, P1W, WP1 // 2, WP1), jnp.bfloat16),
        "w2": jnp.asarray(_banded_weights(w2_kkio, P2W, 128, LANE2), jnp.bfloat16),
        "pmat": jnp.asarray(_fold_matrix(), jnp.bfloat16),
        "g1": jnp.ones((1, C1), jnp.float32), "b1": jnp.zeros((1, C1), jnp.float32),
        "g2": jnp.ones((1, C2), jnp.float32), "b2": jnp.zeros((1, C2), jnp.float32),
        "wfc": jnp.asarray(jnp.transpose(wfc), jnp.bfloat16),            # (C2, NCLS)
        "bfc": bfc.reshape(1, NCLS),
    }
    raw = {"w1": w1, "w2": w2, "wfc": wfc, "bfc": bfc}
    return params, raw


@jax.jit
def cnn_forward(x_nchw, params):
    n = x_nchw.shape[0]
    l1 = _build_l1(x_nchw)                              # only pre-kernel glue
    return pl.pallas_call(
        cnn_kernel,
        out_shape=jax.ShapeDtypeStruct((n, NCLS), jnp.float32),
        in_specs=[_vmem() for _ in range(10)],
        out_specs=_vmem(),
    )(l1, params["w1"], params["g1"], params["b1"], params["pmat"],
      params["w2"], params["g2"], params["b2"], params["wfc"], params["bfc"])


# --------------------------------------------------------------------------
# pure-JAX f32 reference (same training-mode BN semantics as the module)
# --------------------------------------------------------------------------
def _reference(x, raw):
    def conv(y, w_oihw):
        w = jnp.transpose(w_oihw, (2, 3, 1, 0))                       # HWIO
        return jax.lax.conv_general_dilated(
            y, w, (1, 1), ((2, 2), (2, 2)),
            dimension_numbers=("NHWC", "HWIO", "NHWC"))

    def bn(y):
        m = jnp.mean(y, axis=(0, 1, 2), keepdims=True)
        v = jnp.mean((y - m) ** 2, axis=(0, 1, 2), keepdims=True)
        return (y - m) * jax.lax.rsqrt(v + EPS)

    def pool(y):
        n, h, w, c = y.shape
        return jnp.max(y.reshape(n, h // 2, 2, w // 2, 2, c), axis=(2, 4))

    y = jnp.transpose(x, (0, 2, 3, 1))
    y = pool(jnp.maximum(bn(conv(y, raw["w1"])), 0.0))
    y = pool(jnp.maximum(bn(conv(y, raw["w2"])), 0.0))
    g = jnp.mean(y, axis=(1, 2))
    return g @ jnp.transpose(raw["wfc"]) + raw["bfc"]


if __name__ == "__main__":
    key = jax.random.PRNGKey(0)
    kx, kp = jax.random.split(key)
    x = jax.random.normal(kx, (2, 1, H, W), jnp.float32)    # NCHW, like the PyTorch module
    params, raw = init_params(kp)

    out = jax.block_until_ready(cnn_forward(x, params))
    assert out.shape == (2, NCLS) and out.dtype == jnp.float32

    ref = jax.block_until_ready(_reference(x, raw))
    err = float(jnp.max(jnp.abs(out - ref)))
    # loose tolerance: kernel matmul operands are bf16 (f32 accumulation)
    assert err < 2e-1, f"mismatch vs f32 reference: max abs err {err}"
    print("KERNEL_OK")
</pallas_src>

<mosaic_0001>
module attributes {stable_mosaic.version = 11 : i64} {
  func.func @cnn_kernel(%arg0: memref<2x16x100xbf16, #tpu.memory_space<vmem>>, %arg1: memref<100x256xbf16, #tpu.memory_space<vmem>>, %arg2: memref<1x16xf32, #tpu.memory_space<vmem>>, %arg3: memref<1x16xf32, #tpu.memory_space<vmem>>, %arg4: memref<128x256xbf16, #tpu.memory_space<vmem>>, %arg5: memref<1280x256xbf16, #tpu.memory_space<vmem>>, %arg6: memref<1x32xf32, #tpu.memory_space<vmem>>, %arg7: memref<1x32xf32, #tpu.memory_space<vmem>>, %arg8: memref<32x10xbf16, #tpu.memory_space<vmem>>, %arg9: memref<1x10xf32, #tpu.memory_space<vmem>>, %arg10: memref<2x10xf32, #tpu.memory_space<vmem>>) attributes {dimension_semantics = [], scalar_prefetch = 0 : i64, scratch_operands = 0 : i64, tpu.core_type = #tpu.core_type<tc>} {
    %c0 = arith.constant 0 : index
    %c0_0 = arith.constant 0 : index
    %0 = vector.load %arg1[%c0, %c0_0] : memref<100x256xbf16, #tpu.memory_space<vmem>>, vector<100x256xbf16>
    %c0_1 = arith.constant 0 : index
    %c0_2 = arith.constant 0 : index
    %c0_3 = arith.constant 0 : index
    %1 = vector.load %arg0[%c0_1, %c0_2, %c0_3] : memref<2x16x100xbf16, #tpu.memory_space<vmem>>, vector<1x16x100xbf16>
    %2 = vector.shape_cast %1 : vector<1x16x100xbf16> to vector<16x100xbf16>
    %cst = arith.constant dense<0.000000e+00> : vector<16x256xf32>
    %3 = tpu.matmul %2, %0, %cst {dimension_numbers = #tpu.dot_dimension_numbers<[1], [0], [0], [1], [0, 0, 1, 1], [], []>} : vector<16x100xbf16>, vector<100x256xbf16>, vector<16x256xf32> -> vector<16x256xf32>
    %c1 = arith.constant 1 : index
    %c0_4 = arith.constant 0 : index
    %c0_5 = arith.constant 0 : index
    %4 = vector.load %arg0[%c1, %c0_4, %c0_5] : memref<2x16x100xbf16, #tpu.memory_space<vmem>>, vector<1x16x100xbf16>
    %5 = vector.shape_cast %4 : vector<1x16x100xbf16> to vector<16x100xbf16>
    %cst_6 = arith.constant dense<0.000000e+00> : vector<16x256xf32>
    %6 = tpu.matmul %5, %0, %cst_6 {dimension_numbers = #tpu.dot_dimension_numbers<[1], [0], [0], [1], [0, 0, 1, 1], [], []>} : vector<16x100xbf16>, vector<100x256xbf16>, vector<16x256xf32> -> vector<16x256xf32>
    %c0_7 = arith.constant 0 : index
    %c0_8 = arith.constant 0 : index
    %7 = vector.load %arg2[%c0_7, %c0_8] : memref<1x16xf32, #tpu.memory_space<vmem>>, vector<1x16xf32>
    %c0_9 = arith.constant 0 : index
    %c0_10 = arith.constant 0 : index
    %8 = vector.load %arg3[%c0_9, %c0_10] : memref<1x16xf32, #tpu.memory_space<vmem>>, vector<1x16xf32>
    %cst_11 = arith.constant 0.000000e+00 : f32
    %9 = vector.broadcast %cst_11 : f32 to vector<1x256xf32>
    %cst_12 = arith.constant 0.000000e+00 : f32
    %10 = vector.broadcast %cst_12 : f32 to vector<1x256xf32>
    %cst_13 = arith.constant dense<0.000000e+00> : vector<256xf32>
    %11 = vector.multi_reduction <add>, %3, %cst_13 [0] : vector<16x256xf32> to vector<256xf32>
    %12 = vector.shape_cast %11 : vector<256xf32> to vector<1x256xf32>
    %13 = arith.addf %9, %12 : vector<1x256xf32>
    %14 = arith.mulf %3, %3 : vector<16x256xf32>
    %cst_14 = arith.constant dense<0.000000e+00> : vector<256xf32>
    %15 = vector.multi_reduction <add>, %14, %cst_14 [0] : vector<16x256xf32> to vector<256xf32>
    %16 = vector.shape_cast %15 : vector<256xf32> to vector<1x256xf32>
    %17 = arith.addf %10, %16 : vector<1x256xf32>
    %cst_15 = arith.constant dense<0.000000e+00> : vector<256xf32>
    %18 = vector.multi_reduction <add>, %6, %cst_15 [0] : vector<16x256xf32> to vector<256xf32>
    %19 = vector.shape_cast %18 : vector<256xf32> to vector<1x256xf32>
    %20 = arith.addf %13, %19 : vector<1x256xf32>
    %21 = arith.mulf %6, %6 : vector<16x256xf32>
    %cst_16 = arith.constant dense<0.000000e+00> : vector<256xf32>
    %22 = vector.multi_reduction <add>, %21, %cst_16 [0] : vector<16x256xf32> to vector<256xf32>
    %23 = vector.shape_cast %22 : vector<256xf32> to vector<1x256xf32>
    %24 = arith.addf %17, %23 : vector<1x256xf32>
    %cst_17 = arith.constant 0.000000e+00 : f32
    %25 = vector.broadcast %cst_17 : f32 to vector<1x16xf32>
    %cst_18 = arith.constant 0.000000e+00 : f32
    %26 = vector.broadcast %cst_18 : f32 to vector<1x16xf32>
    %27 = vector.extract_strided_slice %20 {offsets = [0, 0], sizes = [1, 16], strides = [1, 1]} : vector<1x256xf32> to vector<1x16xf32>
    %28 = arith.addf %25, %27 : vector<1x16xf32>
    %29 = vector.extract_strided_slice %24 {offsets = [0, 0], sizes = [1, 16], strides = [1, 1]} : vector<1x256xf32> to vector<1x16xf32>
    %30 = arith.addf %26, %29 : vector<1x16xf32>
    %31 = vector.extract_strided_slice %20 {offsets = [0, 16], sizes = [1, 16], strides = [1, 1]} : vector<1x256xf32> to vector<1x16xf32>
    %32 = arith.addf %28, %31 : vector<1x16xf32>
    %33 = vector.extract_strided_slice %24 {offsets = [0, 16], sizes = [1, 16], strides = [1, 1]} : vector<1x256xf32> to vector<1x16xf32>
    %34 = arith.addf %30, %33 : vector<1x16xf32>
    %35 = vector.extract_strided_slice %20 {offsets = [0, 32], sizes = [1, 16], strides = [1, 1]} : vector<1x256xf32> to vector<1x16xf32>
    %36 = arith.addf %32, %35 : vector<1x16xf32>
    %37 = vector.extract_strided_slice %24 {offsets = [0, 32], sizes = [1, 16], strides = [1, 1]} : vector<1x256xf32> to vector<1x16xf32>
    %38 = arith.addf %34, %37 : vector<1x16xf32>
    %39 = vector.extract_strided_slice %20 {offsets = [0, 48], sizes = [1, 16], strides = [1, 1]} : vector<1x256xf32> to vector<1x16xf32>
    %40 = arith.addf %36, %39 : vector<1x16xf32>
    %41 = vector.extract_strided_slice %24 {offsets = [0, 48], sizes = [1, 16], strides = [1, 1]} : vector<1x256xf32> to vector<1x16xf32>
    %42 = arith.addf %38, %41 : vector<1x16xf32>
    %43 = vector.extract_strided_slice %20 {offsets = [0, 64], sizes = [1, 16], strides = [1, 1]} : vector<1x256xf32> to vector<1x16xf32>
    %44 = arith.addf %40, %43 : vector<1x16xf32>
    %45 = vector.extract_strided_slice %24 {offsets = [0, 64], sizes = [1, 16], strides = [1, 1]} : vector<1x256xf32> to vector<1x16xf32>
    %46 = arith.addf %42, %45 : vector<1x16xf32>
    %47 = vector.extract_strided_slice %20 {offsets = [0, 80], sizes = [1, 16], strides = [1, 1]} : vector<1x256xf32> to vector<1x16xf32>
    %48 = arith.addf %44, %47 : vector<1x16xf32>
    %49 = vector.extract_strided_slice %24 {offsets = [0, 80], sizes = [1, 16], strides = [1, 1]} : vector<1x256xf32> to vector<1x16xf32>
    %50 = arith.addf %46, %49 : vector<1x16xf32>
    %51 = vector.extract_strided_slice %20 {offsets = [0, 96], sizes = [1, 16], strides = [1, 1]} : vector<1x256xf32> to vector<1x16xf32>
    %52 = arith.addf %48, %51 : vector<1x16xf32>
    %53 = vector.extract_strided_slice %24 {offsets = [0, 96], sizes = [1, 16], strides = [1, 1]} : vector<1x256xf32> to vector<1x16xf32>
    %54 = arith.addf %50, %53 : vector<1x16xf32>
    %55 = vector.extract_strided_slice %20 {offsets = [0, 112], sizes = [1, 16], strides = [1, 1]} : vector<1x256xf32> to vector<1x16xf32>
    %56 = arith.addf %52, %55 : vector<1x16xf32>
    %57 = vector.extract_strided_slice %24 {offsets = [0, 112], sizes = [1, 16], strides = [1, 1]} : vector<1x256xf32> to vector<1x16xf32>
    %58 = arith.addf %54, %57 : vector<1x16xf32>
    %59 = vector.extract_strided_slice %20 {offsets = [0, 128], sizes = [1, 16], strides = [1, 1]} : vector<1x256xf32> to vector<1x16xf32>
    %60 = arith.addf %56, %59 : vector<1x16xf32>
    %61 = vector.extract_strided_slice %24 {offsets = [0, 128], sizes = [1, 16], strides = [1, 1]} : vector<1x256xf32> to vector<1x16xf32>
    %62 = arith.addf %58, %61 : vector<1x16xf32>
    %63 = vector.extract_strided_slice %20 {offsets = [0, 144], sizes = [1, 16], strides = [1, 1]} : vector<1x256xf32> to vector<1x16xf32>
    %64 = arith.addf %60, %63 : vector<1x16xf32>
    %65 = vector.extract_strided_slice %24 {offsets = [0, 144], sizes = [1, 16], strides = [1, 1]} : vector<1x256xf32> to vector<1x16xf32>
    %66 = arith.addf %62, %65 : vector<1x16xf32>
    %67 = vector.extract_strided_slice %20 {offsets = [0, 160], sizes = [1, 16], strides = [1, 1]} : vector<1x256xf32> to vector<1x16xf32>
    %68 = arith.addf %64, %67 : vector<1x16xf32>
    %69 = vector.extract_strided_slice %24 {offsets = [0, 160], sizes = [1, 16], strides = [1, 1]} : vector<1x256xf32> to vector<1x16xf32>
    %70 = arith.addf %66, %69 : vector<1x16xf32>
    %71 = vector.extract_strided_slice %20 {offsets = [0, 176], sizes = [1, 16], strides = [1, 1]} : vector<1x256xf32> to vector<1x16xf32>
    %72 = arith.addf %68, %71 : vector<1x16xf32>
    %73 = vector.extract_strided_slice %24 {offsets = [0, 176], sizes = [1, 16], strides = [1, 1]} : vector<1x256xf32> to vector<1x16xf32>
    %74 = arith.addf %70, %73 : vector<1x16xf32>
    %75 = vector.extract_strided_slice %20 {offsets = [0, 192], sizes = [1, 16], strides = [1, 1]} : vector<1x256xf32> to vector<1x16xf32>
    %76 = arith.addf %72, %75 : vector<1x16xf32>
    %77 = vector.extract_strided_slice %24 {offsets = [0, 192], sizes = [1, 16], strides = [1, 1]} : vector<1x256xf32> to vector<1x16xf32>
    %78 = arith.addf %74, %77 : vector<1x16xf32>
    %79 = vector.extract_strided_slice %20 {offsets = [0, 208], sizes = [1, 16], strides = [1, 1]} : vector<1x256xf32> to vector<1x16xf32>
    %80 = arith.addf %76, %79 : vector<1x16xf32>
    %81 = vector.extract_strided_slice %24 {offsets = [0, 208], sizes = [1, 16], strides = [1, 1]} : vector<1x256xf32> to vector<1x16xf32>
    %82 = arith.addf %78, %81 : vector<1x16xf32>
    %83 = vector.extract_strided_slice %20 {offsets = [0, 224], sizes = [1, 16], strides = [1, 1]} : vector<1x256xf32> to vector<1x16xf32>
    %84 = arith.addf %80, %83 : vector<1x16xf32>
    %85 = vector.extract_strided_slice %24 {offsets = [0, 224], sizes = [1, 16], strides = [1, 1]} : vector<1x256xf32> to vector<1x16xf32>
    %86 = arith.addf %82, %85 : vector<1x16xf32>
    %87 = vector.extract_strided_slice %20 {offsets = [0, 240], sizes = [1, 16], strides = [1, 1]} : vector<1x256xf32> to vector<1x16xf32>
    %88 = arith.addf %84, %87 : vector<1x16xf32>
    %89 = vector.extract_strided_slice %24 {offsets = [0, 240], sizes = [1, 16], strides = [1, 1]} : vector<1x256xf32> to vector<1x16xf32>
    %90 = arith.addf %86, %89 : vector<1x16xf32>
    %cst_19 = arith.constant 0.001953125 : f32
    %91 = vector.broadcast %cst_19 : f32 to vector<1x16xf32>
    %92 = arith.mulf %88, %91 : vector<1x16xf32>
    %cst_20 = arith.constant 0.001953125 : f32
    %93 = vector.broadcast %cst_20 : f32 to vector<1x16xf32>
    %94 = arith.mulf %90, %93 : vector<1x16xf32>
    %95 = arith.mulf %92, %92 : vector<1x16xf32>
    %96 = arith.subf %94, %95 : vector<1x16xf32>
    %cst_21 = arith.constant 0.000000e+00 : f32
    %97 = vector.broadcast %cst_21 : f32 to vector<1x16xf32>
    %98 = arith.maximumf %96, %97 : vector<1x16xf32>
    %cst_22 = arith.constant 9.99999974E-6 : f32
    %99 = vector.broadcast %cst_22 : f32 to vector<1x16xf32>
    %100 = arith.addf %98, %99 : vector<1x16xf32>
    %101 = math.rsqrt %100 : vector<1x16xf32>
    %102 = arith.mulf %7, %101 : vector<1x16xf32>
    %103 = arith.mulf %92, %102 : vector<1x16xf32>
    %104 = arith.subf %8, %103 : vector<1x16xf32>
    %105 = tpu.concatenate %102, %102, %102, %102, %102, %102, %102, %102, %102, %102, %102, %102, %102, %102, %102, %102 in 1 : vector<1x16xf32>, vector<1x16xf32>, vector<1x16xf32>, vector<1x16xf32>, vector<1x16xf32>, vector<1x16xf32>, vector<1x16xf32>, vector<1x16xf32>, vector<1x16xf32>, vector<1x16xf32>, vector<1x16xf32>, vector<1x16xf32>, vector<1x16xf32>, vector<1x16xf32>, vector<1x16xf32>, vector<1x16xf32> -> vector<1x256xf32>
    %106 = tpu.concatenate %104, %104, %104, %104, %104, %104, %104, %104, %104, %104, %104, %104, %104, %104, %104, %104 in 1 : vector<1x16xf32>, vector<1x16xf32>, vector<1x16xf32>, vector<1x16xf32>, vector<1x16xf32>, vector<1x16xf32>, vector<1x16xf32>, vector<1x16xf32>, vector<1x16xf32>, vector<1x16xf32>, vector<1x16xf32>, vector<1x16xf32>, vector<1x16xf32>, vector<1x16xf32>, vector<1x16xf32>, vector<1x16xf32> -> vector<1x256xf32>
    %107 = vector.broadcast %105 : vector<1x256xf32> to vector<16x256xf32>
    %108 = arith.mulf %3, %107 : vector<16x256xf32>
    %109 = vector.broadcast %106 : vector<1x256xf32> to vector<16x256xf32>
    %110 = arith.addf %108, %109 : vector<16x256xf32>
    %cst_23 = arith.constant 0.000000e+00 : f32
    %111 = vector.broadcast %cst_23 : f32 to vector<16x256xf32>
    %112 = arith.maximumf %110, %111 : vector<16x256xf32>
    %113 = vector.extract_strided_slice %112 {offsets = [0, 0], sizes = [16, 128], strides = [1, 1]} : vector<16x256xf32> to vector<16x128xf32>
    %114 = vector.extract_strided_slice %112 {offsets = [0, 128], sizes = [16, 128], strides = [1, 1]} : vector<16x256xf32> to vector<16x128xf32>
    %115 = arith.maximumf %113, %114 : vector<16x128xf32>
    %116 = vector.broadcast %105 : vector<1x256xf32> to vector<16x256xf32>
    %117 = arith.mulf %6, %116 : vector<16x256xf32>
    %118 = vector.broadcast %106 : vector<1x256xf32> to vector<16x256xf32>
    %119 = arith.addf %117, %118 : vector<16x256xf32>
    %cst_24 = arith.constant 0.000000e+00 : f32
    %120 = vector.broadcast %cst_24 : f32 to vector<16x256xf32>
    %121 = arith.maximumf %119, %120 : vector<16x256xf32>
    %122 = vector.extract_strided_slice %121 {offsets = [0, 0], sizes = [16, 128], strides = [1, 1]} : vector<16x256xf32> to vector<16x128xf32>
    %123 = vector.extract_strided_slice %121 {offsets = [0, 128], sizes = [16, 128], strides = [1, 1]} : vector<16x256xf32> to vector<16x128xf32>
    %124 = arith.maximumf %122, %123 : vector<16x128xf32>
    %125 = arith.maximumf %115, %124 : vector<16x128xf32>
    %126 = arith.truncf %125 : vector<16x128xf32> to vector<16x128xbf16>
    %c0_25 = arith.constant 0 : index
    %c0_26 = arith.constant 0 : index
    %127 = vector.load %arg4[%c0_25, %c0_26] : memref<128x256xbf16, #tpu.memory_space<vmem>>, vector<128x256xbf16>
    %cst_27 = arith.constant dense<0.000000e+00> : vector<16x256xf32>
    %128 = tpu.matmul %126, %127, %cst_27 {dimension_numbers = #tpu.dot_dimension_numbers<[1], [0], [0], [1], [0, 0, 1, 1], [], []>} : vector<16x128xbf16>, vector<128x256xbf16>, vector<16x256xf32> -> vector<16x256xf32>
    %cst_28 = arith.constant 0.000000e+00 : f32
    %129 = vector.broadcast %cst_28 : f32 to vector<1x256xf32>
    %130 = vector.extract_strided_slice %128 {offsets = [0, 0], sizes = [4, 256], strides = [1, 1]} : vector<16x256xf32> to vector<4x256xf32>
    %131 = tpu.concatenate %129, %130, %129 in 0 : vector<1x256xf32>, vector<4x256xf32>, vector<1x256xf32> -> vector<6x256xf32>
    %132 = vector.extract_strided_slice %128 {offsets = [4, 0], sizes = [4, 256], strides = [1, 1]} : vector<16x256xf32> to vector<4x256xf32>
    %133 = tpu.concatenate %129, %132, %129 in 0 : vector<1x256xf32>, vector<4x256xf32>, vector<1x256xf32> -> vector<6x256xf32>
    %134 = vector.extract_strided_slice %128 {offsets = [8, 0], sizes = [4, 256], strides = [1, 1]} : vector<16x256xf32> to vector<4x256xf32>
    %135 = tpu.concatenate %129, %134, %129 in 0 : vector<1x256xf32>, vector<4x256xf32>, vector<1x256xf32> -> vector<6x256xf32>
    %136 = vector.extract_strided_slice %128 {offsets = [12, 0], sizes = [4, 256], strides = [1, 1]} : vector<16x256xf32> to vector<4x256xf32>
    %137 = tpu.concatenate %129, %136, %129 in 0 : vector<1x256xf32>, vector<4x256xf32>, vector<1x256xf32> -> vector<6x256xf32>
    %c0_29 = arith.constant 0 : index
    %c0_30 = arith.constant 0 : index
    %138 = vector.load %arg5[%c0_29, %c0_30] : memref<1280x256xbf16, #tpu.memory_space<vmem>>, vector<1280x256xbf16>
    %139 = vector.extract_strided_slice %131 {offsets = [0, 0], sizes = [4, 256], strides = [1, 1]} : vector<6x256xf32> to vector<4x256xf32>
    %140 = vector.extract_strided_slice %133 {offsets = [0, 0], sizes = [4, 256], strides = [1, 1]} : vector<6x256xf32> to vector<4x256xf32>
    %141 = tpu.concatenate %139, %140 in 0 : vector<4x256xf32>, vector<4x256xf32> -> vector<8x256xf32>
    %142 = vector.extract_strided_slice %135 {offsets = [0, 0], sizes = [4, 256], strides = [1, 1]} : vector<6x256xf32> to vector<4x256xf32>
    %143 = vector.extract_strided_slice %137 {offsets = [0, 0], sizes = [4, 256], strides = [1, 1]} : vector<6x256xf32> to vector<4x256xf32>
    %144 = tpu.concatenate %142, %143 in 0 : vector<4x256xf32>, vector<4x256xf32> -> vector<8x256xf32>
    %145 = vector.extract_strided_slice %131 {offsets = [1, 0], sizes = [4, 256], strides = [1, 1]} : vector<6x256xf32> to vector<4x256xf32>
    %146 = vector.extract_strided_slice %133 {offsets = [1, 0], sizes = [4, 256], strides = [1, 1]} : vector<6x256xf32> to vector<4x256xf32>
    %147 = tpu.concatenate %145, %146 in 0 : vector<4x256xf32>, vector<4x256xf32> -> vector<8x256xf32>
    %148 = vector.extract_strided_slice %135 {offsets = [1, 0], sizes = [4, 256], strides = [1, 1]} : vector<6x256xf32> to vector<4x256xf32>
    %149 = vector.extract_strided_slice %137 {offsets = [1, 0], sizes = [4, 256], strides = [1, 1]} : vector<6x256xf32> to vector<4x256xf32>
    %150 = tpu.concatenate %148, %149 in 0 : vector<4x256xf32>, vector<4x256xf32> -> vector<8x256xf32>
    %151 = vector.extract_strided_slice %131 {offsets = [2, 0], sizes = [4, 256], strides = [1, 1]} : vector<6x256xf32> to vector<4x256xf32>
    %152 = vector.extract_strided_slice %133 {offsets = [2, 0], sizes = [4, 256], strides = [1, 1]} : vector<6x256xf32> to vector<4x256xf32>
    %153 = tpu.concatenate %151, %152 in 0 : vector<4x256xf32>, vector<4x256xf32> -> vector<8x256xf32>
    %154 = tpu.concatenate %141, %144, %147, %150, %153 in 1 : vector<8x256xf32>, vector<8x256xf32>, vector<8x256xf32>, vector<8x256xf32>, vector<8x256xf32> -> vector<8x1280xf32>
    %155 = arith.truncf %154 : vector<8x1280xf32> to vector<8x1280xbf16>
    %cst_31 = arith.constant dense<0.000000e+00> : vector<8x256xf32>
    %156 = tpu.matmul %155, %138, %cst_31 {dimension_numbers = #tpu.dot_dimension_numbers<[1], [0], [0], [1], [0, 0, 1, 1], [], []>} : vector<8x1280xbf16>, vector<1280x256xbf16>, vector<8x256xf32> -> vector<8x256xf32>
    %157 = vector.extract_strided_slice %135 {offsets = [0, 0], sizes = [4, 256], strides = [1, 1]} : vector<6x256xf32> to vector<4x256xf32>
    %158 = vector.extract_strided_slice %137 {offsets = [0, 0], sizes = [4, 256], strides = [1, 1]} : vector<6x256xf32> to vector<4x256xf32>
    %159 = tpu.concatenate %157, %158 in 0 : vector<4x256xf32>, vector<4x256xf32> -> vector<8x256xf32>
    %160 = vector.extract_strided_slice %131 {offsets = [1, 0], sizes = [4, 256], strides = [1, 1]} : vector<6x256xf32> to vector<4x256xf32>
    %161 = vector.extract_strided_slice %133 {offsets = [1, 0], sizes = [4, 256], strides = [1, 1]} : vector<6x256xf32> to vector<4x256xf32>
    %162 = tpu.concatenate %160, %161 in 0 : vector<4x256xf32>, vector<4x256xf32> -> vector<8x256xf32>
    %163 = vector.extract_strided_slice %135 {offsets = [1, 0], sizes = [4, 256], strides = [1, 1]} : vector<6x256xf32> to vector<4x256xf32>
    %164 = vector.extract_strided_slice %137 {offsets = [1, 0], sizes = [4, 256], strides = [1, 1]} : vector<6x256xf32> to vector<4x256xf32>
    %165 = tpu.concatenate %163, %164 in 0 : vector<4x256xf32>, vector<4x256xf32> -> vector<8x256xf32>
    %166 = vector.extract_strided_slice %131 {offsets = [2, 0], sizes = [4, 256], strides = [1, 1]} : vector<6x256xf32> to vector<4x256xf32>
    %167 = vector.extract_strided_slice %133 {offsets = [2, 0], sizes = [4, 256], strides = [1, 1]} : vector<6x256xf32> to vector<4x256xf32>
    %168 = tpu.concatenate %166, %167 in 0 : vector<4x256xf32>, vector<4x256xf32> -> vector<8x256xf32>
    %169 = vector.extract_strided_slice %135 {offsets = [2, 0], sizes = [4, 256], strides = [1, 1]} : vector<6x256xf32> to vector<4x256xf32>
    %170 = vector.extract_strided_slice %137 {offsets = [2, 0], sizes = [4, 256], strides = [1, 1]} : vector<6x256xf32> to vector<4x256xf32>
    %171 = tpu.concatenate %169, %170 in 0 : vector<4x256xf32>, vector<4x256xf32> -> vector<8x256xf32>
    %172 = tpu.concatenate %159, %162, %165, %168, %171 in 1 : vector<8x256xf32>, vector<8x256xf32>, vector<8x256xf32>, vector<8x256xf32>, vector<8x256xf32> -> vector<8x1280xf32>
    %173 = arith.truncf %172 : vector<8x1280xf32> to vector<8x1280xbf16>
    %cst_32 = arith.constant dense<0.000000e+00> : vector<8x256xf32>
    %174 = tpu.matmul %173, %138, %cst_32 {dimension_numbers = #tpu.dot_dimension_numbers<[1], [0], [0], [1], [0, 0, 1, 1], [], []>} : vector<8x1280xbf16>, vector<1280x256xbf16>, vector<8x256xf32> -> vector<8x256xf32>
    %c0_33 = arith.constant 0 : index
    %c0_34 = arith.constant 0 : index
    %175 = vector.load %arg6[%c0_33, %c0_34] : memref<1x32xf32, #tpu.memory_space<vmem>>, vector<1x32xf32>
    %c0_35 = arith.constant 0 : index
    %c0_36 = arith.constant 0 : index
    %176 = vector.load %arg7[%c0_35, %c0_36] : memref<1x32xf32, #tpu.memory_space<vmem>>, vector<1x32xf32>
    %cst_37 = arith.constant 0.000000e+00 : f32
    %177 = vector.broadcast %cst_37 : f32 to vector<1x256xf32>
    %cst_38 = arith.constant 0.000000e+00 : f32
    %178 = vector.broadcast %cst_38 : f32 to vector<1x256xf32>
    %cst_39 = arith.constant dense<0.000000e+00> : vector<256xf32>
    %179 = vector.multi_reduction <add>, %156, %cst_39 [0] : vector<8x256xf32> to vector<256xf32>
    %180 = vector.shape_cast %179 : vector<256xf32> to vector<1x256xf32>
    %181 = arith.addf %177, %180 : vector<1x256xf32>
    %182 = arith.mulf %156, %156 : vector<8x256xf32>
    %cst_40 = arith.constant dense<0.000000e+00> : vector<256xf32>
    %183 = vector.multi_reduction <add>, %182, %cst_40 [0] : vector<8x256xf32> to vector<256xf32>
    %184 = vector.shape_cast %183 : vector<256xf32> to vector<1x256xf32>
    %185 = arith.addf %178, %184 : vector<1x256xf32>
    %cst_41 = arith.constant dense<0.000000e+00> : vector<256xf32>
    %186 = vector.multi_reduction <add>, %174, %cst_41 [0] : vector<8x256xf32> to vector<256xf32>
    %187 = vector.shape_cast %186 : vector<256xf32> to vector<1x256xf32>
    %188 = arith.addf %181, %187 : vector<1x256xf32>
    %189 = arith.mulf %174, %174 : vector<8x256xf32>
    %cst_42 = arith.constant dense<0.000000e+00> : vector<256xf32>
    %190 = vector.multi_reduction <add>, %189, %cst_42 [0] : vector<8x256xf32> to vector<256xf32>
    %191 = vector.shape_cast %190 : vector<256xf32> to vector<1x256xf32>
    %192 = arith.addf %185, %191 : vector<1x256xf32>
    %cst_43 = arith.constant 0.000000e+00 : f32
    %193 = vector.broadcast %cst_43 : f32 to vector<1x32xf32>
    %cst_44 = arith.constant 0.000000e+00 : f32
    %194 = vector.broadcast %cst_44 : f32 to vector<1x32xf32>
    %195 = vector.extract_strided_slice %188 {offsets = [0, 0], sizes = [1, 32], strides = [1, 1]} : vector<1x256xf32> to vector<1x32xf32>
    %196 = arith.addf %193, %195 : vector<1x32xf32>
    %197 = vector.extract_strided_slice %192 {offsets = [0, 0], sizes = [1, 32], strides = [1, 1]} : vector<1x256xf32> to vector<1x32xf32>
    %198 = arith.addf %194, %197 : vector<1x32xf32>
    %199 = vector.extract_strided_slice %188 {offsets = [0, 32], sizes = [1, 32], strides = [1, 1]} : vector<1x256xf32> to vector<1x32xf32>
    %200 = arith.addf %196, %199 : vector<1x32xf32>
    %201 = vector.extract_strided_slice %192 {offsets = [0, 32], sizes = [1, 32], strides = [1, 1]} : vector<1x256xf32> to vector<1x32xf32>
    %202 = arith.addf %198, %201 : vector<1x32xf32>
    %203 = vector.extract_strided_slice %188 {offsets = [0, 64], sizes = [1, 32], strides = [1, 1]} : vector<1x256xf32> to vector<1x32xf32>
    %204 = arith.addf %200, %203 : vector<1x32xf32>
    %205 = vector.extract_strided_slice %192 {offsets = [0, 64], sizes = [1, 32], strides = [1, 1]} : vector<1x256xf32> to vector<1x32xf32>
    %206 = arith.addf %202, %205 : vector<1x32xf32>
    %207 = vector.extract_strided_slice %188 {offsets = [0, 96], sizes = [1, 32], strides = [1, 1]} : vector<1x256xf32> to vector<1x32xf32>
    %208 = arith.addf %204, %207 : vector<1x32xf32>
    %209 = vector.extract_strided_slice %192 {offsets = [0, 96], sizes = [1, 32], strides = [1, 1]} : vector<1x256xf32> to vector<1x32xf32>
    %210 = arith.addf %206, %209 : vector<1x32xf32>
    %211 = vector.extract_strided_slice %188 {offsets = [0, 128], sizes = [1, 32], strides = [1, 1]} : vector<1x256xf32> to vector<1x32xf32>
    %212 = arith.addf %208, %211 : vector<1x32xf32>
    %213 = vector.extract_strided_slice %192 {offsets = [0, 128], sizes = [1, 32], strides = [1, 1]} : vector<1x256xf32> to vector<1x32xf32>
    %214 = arith.addf %210, %213 : vector<1x32xf32>
    %215 = vector.extract_strided_slice %188 {offsets = [0, 160], sizes = [1, 32], strides = [1, 1]} : vector<1x256xf32> to vector<1x32xf32>
    %216 = arith.addf %212, %215 : vector<1x32xf32>
    %217 = vector.extract_strided_slice %192 {offsets = [0, 160], sizes = [1, 32], strides = [1, 1]} : vector<1x256xf32> to vector<1x32xf32>
    %218 = arith.addf %214, %217 : vector<1x32xf32>
    %219 = vector.extract_strided_slice %188 {offsets = [0, 192], sizes = [1, 32], strides = [1, 1]} : vector<1x256xf32> to vector<1x32xf32>
    %220 = arith.addf %216, %219 : vector<1x32xf32>
    %221 = vector.extract_strided_slice %192 {offsets = [0, 192], sizes = [1, 32], strides = [1, 1]} : vector<1x256xf32> to vector<1x32xf32>
    %222 = arith.addf %218, %221 : vector<1x32xf32>
    %223 = vector.extract_strided_slice %188 {offsets = [0, 224], sizes = [1, 32], strides = [1, 1]} : vector<1x256xf32> to vector<1x32xf32>
    %224 = arith.addf %220, %223 : vector<1x32xf32>
    %225 = vector.extract_strided_slice %192 {offsets = [0, 224], sizes = [1, 32], strides = [1, 1]} : vector<1x256xf32> to vector<1x32xf32>
    %226 = arith.addf %222, %225 : vector<1x32xf32>
    %cst_45 = arith.constant 7.812500e-03 : f32
    %227 = vector.broadcast %cst_45 : f32 to vector<1x32xf32>
    %228 = arith.mulf %224, %227 : vector<1x32xf32>
    %cst_46 = arith.constant 7.812500e-03 : f32
    %229 = vector.broadcast %cst_46 : f32 to vector<1x32xf32>
    %230 = arith.mulf %226, %229 : vector<1x32xf32>
    %231 = arith.mulf %228, %228 : vector<1x32xf32>
    %232 = arith.subf %230, %231 : vector<1x32xf32>
    %cst_47 = arith.constant 0.000000e+00 : f32
    %233 = vector.broadcast %cst_47 : f32 to vector<1x32xf32>
    %234 = arith.maximumf %232, %233 : vector<1x32xf32>
    %cst_48 = arith.constant 9.99999974E-6 : f32
    %235 = vector.broadcast %cst_48 : f32 to vector<1x32xf32>
    %236 = arith.addf %234, %235 : vector<1x32xf32>
    %237 = math.rsqrt %236 : vector<1x32xf32>
    %238 = arith.mulf %175, %237 : vector<1x32xf32>
    %239 = arith.mulf %228, %238 : vector<1x32xf32>
    %240 = arith.subf %176, %239 : vector<1x32xf32>
    %241 = tpu.concatenate %238, %238, %238, %238, %238, %238, %238, %238 in 1 : vector<1x32xf32>, vector<1x32xf32>, vector<1x32xf32>, vector<1x32xf32>, vector<1x32xf32>, vector<1x32xf32>, vector<1x32xf32>, vector<1x32xf32> -> vector<1x256xf32>
    %242 = tpu.concatenate %240, %240, %240, %240, %240, %240, %240, %240 in 1 : vector<1x32xf32>, vector<1x32xf32>, vector<1x32xf32>, vector<1x32xf32>, vector<1x32xf32>, vector<1x32xf32>, vector<1x32xf32>, vector<1x32xf32> -> vector<1x256xf32>
    %243 = vector.broadcast %241 : vector<1x256xf32> to vector<8x256xf32>
    %244 = arith.mulf %156, %243 : vector<8x256xf32>
    %245 = vector.broadcast %242 : vector<1x256xf32> to vector<8x256xf32>
    %246 = arith.addf %244, %245 : vector<8x256xf32>
    %cst_49 = arith.constant 0.000000e+00 : f32
    %247 = vector.broadcast %cst_49 : f32 to vector<8x256xf32>
    %248 = arith.maximumf %246, %247 : vector<8x256xf32>
    %249 = vector.extract_strided_slice %248 {offsets = [0, 0], sizes = [8, 128], strides = [1, 1]} : vector<8x256xf32> to vector<8x128xf32>
    %250 = vector.extract_strided_slice %248 {offsets = [0, 128], sizes = [8, 128], strides = [1, 1]} : vector<8x256xf32> to vector<8x128xf32>
    %251 = arith.maximumf %249, %250 : vector<8x128xf32>
    %252 = vector.broadcast %241 : vector<1x256xf32> to vector<8x256xf32>
    %253 = arith.mulf %174, %252 : vector<8x256xf32>
    %254 = vector.broadcast %242 : vector<1x256xf32> to vector<8x256xf32>
    %255 = arith.addf %253, %254 : vector<8x256xf32>
    %cst_50 = arith.constant 0.000000e+00 : f32
    %256 = vector.broadcast %cst_50 : f32 to vector<8x256xf32>
    %257 = arith.maximumf %255, %256 : vector<8x256xf32>
    %258 = vector.extract_strided_slice %257 {offsets = [0, 0], sizes = [8, 128], strides = [1, 1]} : vector<8x256xf32> to vector<8x128xf32>
    %259 = vector.extract_strided_slice %257 {offsets = [0, 128], sizes = [8, 128], strides = [1, 1]} : vector<8x256xf32> to vector<8x128xf32>
    %260 = arith.maximumf %258, %259 : vector<8x128xf32>
    %261 = arith.maximumf %251, %260 : vector<8x128xf32>
    %cst_51 = arith.constant 0.000000e+00 : f32
    %262 = vector.broadcast %cst_51 : f32 to vector<8x32xf32>
    %263 = vector.extract_strided_slice %261 {offsets = [0, 0], sizes = [8, 32], strides = [1, 1]} : vector<8x128xf32> to vector<8x32xf32>
    %264 = arith.addf %262, %263 : vector<8x32xf32>
    %265 = vector.extract_strided_slice %261 {offsets = [0, 32], sizes = [8, 32], strides = [1, 1]} : vector<8x128xf32> to vector<8x32xf32>
    %266 = arith.addf %264, %265 : vector<8x32xf32>
    %267 = vector.extract_strided_slice %261 {offsets = [0, 64], sizes = [8, 32], strides = [1, 1]} : vector<8x128xf32> to vector<8x32xf32>
    %268 = arith.addf %266, %267 : vector<8x32xf32>
    %269 = vector.extract_strided_slice %261 {offsets = [0, 96], sizes = [8, 32], strides = [1, 1]} : vector<8x128xf32> to vector<8x32xf32>
    %270 = arith.addf %268, %269 : vector<8x32xf32>
    %271 = vector.extract_strided_slice %270 {offsets = [0, 0], sizes = [4, 32], strides = [1, 1]} : vector<8x32xf32> to vector<4x32xf32>
    %cst_52 = arith.constant dense<0.000000e+00> : vector<32xf32>
    %272 = vector.multi_reduction <add>, %271, %cst_52 [0] : vector<4x32xf32> to vector<32xf32>
    %273 = vector.shape_cast %272 : vector<32xf32> to vector<1x32xf32>
    %274 = vector.extract_strided_slice %270 {offsets = [4, 0], sizes = [4, 32], strides = [1, 1]} : vector<8x32xf32> to vector<4x32xf32>
    %cst_53 = arith.constant dense<0.000000e+00> : vector<32xf32>
    %275 = vector.multi_reduction <add>, %274, %cst_53 [0] : vector<4x32xf32> to vector<32xf32>
    %276 = vector.shape_cast %275 : vector<32xf32> to vector<1x32xf32>
    %277 = tpu.concatenate %273, %276 in 0 : vector<1x32xf32>, vector<1x32xf32> -> vector<2x32xf32>
    %cst_54 = arith.constant 6.250000e-02 : f32
    %278 = vector.broadcast %cst_54 : f32 to vector<2x32xf32>
    %279 = arith.mulf %277, %278 : vector<2x32xf32>
    %280 = arith.truncf %279 : vector<2x32xf32> to vector<2x32xbf16>
    %c0_55 = arith.constant 0 : index
    %c0_56 = arith.constant 0 : index
    %281 = vector.load %arg8[%c0_55, %c0_56] : memref<32x10xbf16, #tpu.memory_space<vmem>>, vector<32x10xbf16>
    %cst_57 = arith.constant dense<0.000000e+00> : vector<2x10xf32>
    %282 = tpu.matmul %280, %281, %cst_57 {dimension_numbers = #tpu.dot_dimension_numbers<[1], [0], [0], [1], [0, 0, 1, 1], [], []>} : vector<2x32xbf16>, vector<32x10xbf16>, vector<2x10xf32> -> vector<2x10xf32>
    %c0_58 = arith.constant 0 : index
    %c0_59 = arith.constant 0 : index
    %283 = vector.load %arg9[%c0_58, %c0_59] : memref<1x10xf32, #tpu.memory_space<vmem>>, vector<1x10xf32>
    %284 = vector.broadcast %283 : vector<1x10xf32> to vector<2x10xf32>
    %285 = arith.addf %282, %284 : vector<2x10xf32>
    %c0_60 = arith.constant 0 : index
    %c0_61 = arith.constant 0 : index
    %286 = vector.load %arg10[%c0_60, %c0_61] : memref<2x10xf32, #tpu.memory_space<vmem>>, vector<2x10xf32>
    tpu.vector_store %arg10[%c0_60, %c0_61], %285 {strides = array<i32>} : memref<2x10xf32, #tpu.memory_space<vmem>>, vector<2x10xf32>,
    return
  }
}

</mosaic_0001>

<llo_original>
// kernel: cnn_forward.1
$region0: #{cnn_forward.1}
  #allocation0 [shape = 'u32[]', space=smem, size = 0x4, offset = 0x4, fixed_abs, tag = 'smem constant byte address 0x4 - core index']
  #allocation1 [shape = 'u32[72,128]{1,0:T(1,128)}', space=vmem, size = 0x9000, scoped, tag = 'internal scratch']
  %s0 = inlined_call_operand.vmem [shape: bf16[2,16,100], index: 0, kind: input, shape index: {}]
  %s1 = inlined_call_operand.vmem [shape: bf16[100,256], index: 1, kind: input, shape index: {}]
  %s2 = inlined_call_operand.vmem [shape: f32[1,16], index: 2, kind: input, shape index: {}]
  %s3 = inlined_call_operand.vmem [shape: f32[1,16], index: 3, kind: input, shape index: {}]
  %s4 = inlined_call_operand.vmem [shape: bf16[128,256], index: 4, kind: input, shape index: {}]
  %s5 = inlined_call_operand.hbm [shape: bf16[1280,256], index: 5, kind: input, shape index: {}]
  %s6 = inlined_call_operand.vmem [shape: f32[1,32], index: 6, kind: input, shape index: {}]
  %s7 = inlined_call_operand.vmem [shape: f32[1,32], index: 7, kind: input, shape index: {}]
  %s8 = inlined_call_operand.vmem [shape: bf16[32,10], index: 8, kind: input, shape index: {}]
  %s9 = inlined_call_operand.vmem [shape: f32[1,10], index: 9, kind: input, shape index: {}]
  %s10 = inlined_call_operand.hbm [shape: f32[2,10], index: 10, kind: output, shape index: {}]
  %s11 = sld [smem:[#allocation0]]
  $region54: #{cnn_forward.1} parent=0
    _
  %s13 = ssub.s32 1, %s11
  %s14 = scalar_select 0, %s13, %s11
  $region1: #{cnn_forward.1} parent=0
    #allocation2 [shape = 'u8[655360]{0}', space=vmem, size = 0xa0000, scoped, tag = 'input window, operand 5, single buffered']
    #allocation3 [shape = 's32[1]{0}', space=sflag, size = 0x4, scoped, tag = 'scoped memory for cnn_forward.1']
    #allocation4 [shape = 's32[1]{0}', space=sflag, size = 0x4, scoped, tag = 'scoped memory for cnn_forward.1']
    #allocation5 [shape = 'u8[1024]{0}', space=vmem, size = 0x400, scoped, tag = 'output window, operand 0, single buffered']
    %15 = vsyncpa [#allocation3], 0
    %16 = vsyncpa [#allocation4], 0
    // Predicated region
    $region2: #{cnn_forward.1} parent=1 // pred_check
      _
    $region3: #{cnn_forward.1} parent=1 // pred_check_branch
      %18 = sbr.rel (0) target = $region5
    $region4: #{cnn_forward.1} parent=1 // pred_region
      _
    $region5: #{cnn_forward.1} parent=1 // pred_fallthru
      _
    // Predicated region
    $region6: #{cnn_forward.1} parent=1 // pred_check
      _
    $region7: #{cnn_forward.1} parent=1 // pred_check_branch
      %20 = sbr.rel (0) target = $region9
    $region8: #{cnn_forward.1} parent=1 // pred_region
      _
    $region9: #{cnn_forward.1} parent=1 // pred_fallthru
      _
    // Predicated region
    $region10: #{cnn_forward.1} parent=1 // pred_check
      _
    $region11: #{cnn_forward.1} parent=1 // pred_check_branch
      %22 = sbr.rel (0) target = $region13
    $region12: #{cnn_forward.1} parent=1 // pred_region
      _
    $region13: #{cnn_forward.1} parent=1 // pred_fallthru
      _
    // Predicated region
    $region14: #{cnn_forward.1} parent=1 // pred_check
      _
    $region15: #{cnn_forward.1} parent=1 // pred_check_branch
      %24 = sbr.rel (0) target = $region17
    $region16: #{cnn_forward.1} parent=1 // pred_region
      _
    $region17: #{cnn_forward.1} parent=1 // pred_fallthru
      _
    // Predicated region
    $region18: #{cnn_forward.1} parent=1 // pred_check
      _
    $region19: #{cnn_forward.1} parent=1 // pred_check_branch
      %26 = sbr.rel (0) target = $region21
    $region20: #{cnn_forward.1} parent=1 // pred_region
      _
    $region21: #{cnn_forward.1} parent=1 // pred_fallthru
      _
    // Predicated region
    $region22: #{cnn_forward.1} parent=1 // pred_check
      _
    $region23: #{cnn_forward.1} parent=1 // pred_check_branch
      %28 = sbr.rel (0) target = $region25
    $region24: #{cnn_forward.1} parent=1 // pred_region
      %30 = vsyncadd [#allocation3], 0
      %s31 = sshll.u32 %s5, 4
      %s32 = int_to_ptr.hbm [resolvable:$true] %s31
      %s33 = sshll.u32 [#allocation2], 4
      %s34 = int_to_ptr.vmem [resolvable:$true] %s33
      %39 = dma.hbm_to_vmem [thread:$0]  %s32, 20480, %s34, [#allocation3], 128, 128, 8
    $region25: #{cnn_forward.1} parent=1 // pred_fallthru
      _
    // Predicated region
    $region26: #{cnn_forward.1} parent=1 // pred_check
      _
    $region27: #{cnn_forward.1} parent=1 // pred_check_branch
      %41 = sbr.rel (0) target = $region29
    $region28: #{cnn_forward.1} parent=1 // pred_region
      _
    $region29: #{cnn_forward.1} parent=1 // pred_fallthru
      _
    // Predicated region
    $region30: #{cnn_forward.1} parent=1 // pred_check
      _
    $region31: #{cnn_forward.1} parent=1 // pred_check_branch
      %43 = sbr.rel (0) target = $region33
    $region32: #{cnn_forward.1} parent=1 // pred_region
      _
    $region33: #{cnn_forward.1} parent=1 // pred_fallthru
      _
    // Predicated region
    $region34: #{cnn_forward.1} parent=1 // pred_check
      _
    $region35: #{cnn_forward.1} parent=1 // pred_check_branch
      %45 = sbr.rel (0) target = $region37
    $region36: #{cnn_forward.1} parent=1 // pred_region
      _
    $region37: #{cnn_forward.1} parent=1 // pred_fallthru
      _
    // Predicated region
    $region38: #{cnn_forward.1} parent=1 // pred_check
      _
    $region39: #{cnn_forward.1} parent=1 // pred_check_branch
      %47 = sbr.rel (0) target = $region41
    $region40: #{cnn_forward.1} parent=1 // pred_region
      _
    $region41: #{cnn_forward.1} parent=1 // pred_fallthru
      _
    // Predicated region
    $region42: #{cnn_forward.1} parent=1 // pred_check
      _
    $region43: #{cnn_forward.1} parent=1 // pred_check_branch
      %49 = sbr.rel (0) target = $region45
    $region44: #{cnn_forward.1} parent=1 // pred_region
      %51 = dma.done [#allocation3], 20480
    $region45: #{cnn_forward.1} parent=1 // pred_fallthru
      _
    %v53 = vld [vmem:[%s1] sm:$0xff]
    %v54 = vld [vmem:[%s1 + $0x8] sm:$0xff]
    %v55 = vld [vmem:[%s1 + $0x10] sm:$0xff]
    %v56 = vld [vmem:[%s1 + $0x18] sm:$0xff]
    %v57 = vld [vmem:[%s1 + $0x20] sm:$0xff]
    %v58 = vld [vmem:[%s1 + $0x28] sm:$0xff]
    %v59 = vld [vmem:[%s1 + $0x30] sm:$0xff]
    %v60 = vld [vmem:[%s1 + $0x38] sm:$0xff]
    %v61 = vld [vmem:[%s1 + $0x40] sm:$0xff]
    %v62 = vld [vmem:[%s1 + $0x48] sm:$0xff]
    %v63 = vld [vmem:[%s1 + $0x50] sm:$0xff]
    %v64 = vld [vmem:[%s1 + $0x58] sm:$0xff]
    %v65 = vld [vmem:[%s1 + $0x60] sm:$0x33]
    %v66 = vld [vmem:[%s0] sm:$0xf]
    %v67 = vld [vmem:[%s0 + $0x4] sm:$0xf]
    %v70 = vunpack.c.l.b16 %v66
    %v71 = vunpack.c.l.b16 %v67
    %v72 = vpack.c.b16 %v71, %v70
    %v86 = vunpack.c.l.b16 %v53
    %v87 = vunpack.c.h.b16 %v53
    %v88 = vunpack.c.l.b16 %v54
    %v89 = vunpack.c.h.b16 %v54
    %v90 = vunpack.c.l.b16 %v55
    %v91 = vunpack.c.h.b16 %v55
    %v92 = vunpack.c.l.b16 %v56
    %v93 = vunpack.c.h.b16 %v56
    %v94 = vunpack.c.l.b16 %v57
    %v95 = vunpack.c.h.b16 %v57
    %v96 = vunpack.c.l.b16 %v58
    %v97 = vunpack.c.h.b16 %v58
    %v98 = vunpack.c.l.b16 %v59
    %v99 = vunpack.c.h.b16 %v59
    %v100 = vunpack.c.l.b16 %v60
    %v101 = vunpack.c.h.b16 %v60
    %v102 = vunpack.c.l.b16 %v61
    %v103 = vunpack.c.h.b16 %v61
    %v104 = vunpack.c.l.b16 %v62
    %v105 = vunpack.c.h.b16 %v62
    %v106 = vunpack.c.l.b16 %v63
    %v107 = vunpack.c.h.b16 %v63
    %v108 = vunpack.c.l.b16 %v64
    %v109 = vunpack.c.h.b16 %v64
    %v110 = vunpack.c.l.b16 %v65
    %v111 = vunpack.c.h.b16 %v65
    %v112 = vpack.c.b16 %v88, %v86
    %v113 = vpack.c.b16 %v89, %v87
    %v114 = vpack.c.b16 %v92, %v90
    %v115 = vpack.c.b16 %v93, %v91
    %v116 = vpack.c.b16 %v96, %v94
    %v117 = vpack.c.b16 %v97, %v95
    %v118 = vpack.c.b16 %v100, %v98
    %v119 = vpack.c.b16 %v101, %v99
    %v120 = vpack.c.b16 %v104, %v102
    %v121 = vpack.c.b16 %v105, %v103
    %v122 = vpack.c.b16 %v108, %v106
    %v123 = vpack.c.b16 %v109, %v107
    %v124 = vpack.c.b16 %v110, %v110
    %v125 = vpack.c.b16 %v111, %v111
    %vm138 = vcmask 818176
    %v140 = vsel %vm138, %v72, 0
    %vm142 = vcmask 1041408
    %v144 = vsel %vm142, %v124, 0
    %v147 = vsel %vm142, %v125, 0
    %149 = vmatpush.bf16.msra.mxu0 0
    %150 = vmatpush.bf16.msra.mxu0 %v144
    %151 = vmatpush.bf16.msra.mxu0 %v122
    %152 = vmatpush.bf16.msra.mxu0 %v120
    %153 = vmatpush.bf16.msra.mxu0 %v118
    %154 = vmatpush.bf16.msra.mxu0 %v116
    %155 = vmatpush.bf16.msra.mxu0 %v114
    %156 = vmatpush.bf16.msra.mxu0 %v112
    %157 = vmatmul.bf16.gmra.mxu0 %v140
    %v158 = vpop.f32.mrf.mxu0
    %v159 = vadd.f32 0.0, %v158
    %v160 = vpop.f32.mrf.mxu0
    %v161 = vadd.f32 0.0, %v160
    %162 = vdwg.mxu0
    %163 = vmatpush.bf16.msra.mxu0 0
    %164 = vmatpush.bf16.msra.mxu0 %v147
    %165 = vmatpush.bf16.msra.mxu0 %v123
    %166 = vmatpush.bf16.msra.mxu0 %v121
    %167 = vmatpush.bf16.msra.mxu0 %v119
    %168 = vmatpush.bf16.msra.mxu0 %v117
    %169 = vmatpush.bf16.msra.mxu0 %v115
    %170 = vmatpush.bf16.msra.mxu0 %v113
    %171 = vmatmul.bf16.gmra.mxu0 %v140
    %v172 = vpop.f32.mrf.mxu0
    %v173 = vadd.f32 0.0, %v172
    %v174 = vpop.f32.mrf.mxu0
    %v175 = vadd.f32 0.0, %v174
    %176 = vdwg.mxu0
    %s177 = scalar_lea.vmem %s0, 8
    %v178 = vld [vmem:[%s177] sm:$0xf]
    %v179 = vld [vmem:[%s177 + $0x4] sm:$0xf]
    %v182 = vunpack.c.l.b16 %v178
    %v183 = vunpack.c.l.b16 %v179
    %v184 = vpack.c.b16 %v183, %v182
    %v186 = vsel %vm138, %v184, 0
    %188 = vmatpush.bf16.msra.mxu0 0
    %189 = vmatpush.bf16.msra.mxu0 %v144
    %190 = vmatpush.bf16.msra.mxu0 %v122
    %191 = vmatpush.bf16.msra.mxu0 %v120
    %192 = vmatpush.bf16.msra.mxu0 %v118
    %193 = vmatpush.bf16.msra.mxu0 %v116
    %194 = vmatpush.bf16.msra.mxu0 %v114
    %195 = vmatpush.bf16.msra.mxu0 %v112
    %196 = vmatmul.bf16.gmra.mxu0 %v186
    %v197 = vpop.f32.mrf.mxu0
    %v198 = vadd.f32 0.0, %v197
    %v199 = vpop.f32.mrf.mxu0
    %v200 = vadd.f32 0.0, %v199
    %201 = vdwg.mxu0
    %202 = vmatpush.bf16.msra.mxu0 0
    %203 = vmatpush.bf16.msra.mxu0 %v147
    %204 = vmatpush.bf16.msra.mxu0 %v123
    %205 = vmatpush.bf16.msra.mxu0 %v121
    %206 = vmatpush.bf16.msra.mxu0 %v119
    %207 = vmatpush.bf16.msra.mxu0 %v117
    %208 = vmatpush.bf16.msra.mxu0 %v115
    %209 = vmatpush.bf16.msra.mxu0 %v113
    %210 = vmatmul.bf16.gmra.mxu0 %v186
    %v211 = vpop.f32.mrf.mxu0
    %v212 = vadd.f32 0.0, %v211
    %v213 = vpop.f32.mrf.mxu0
    %v214 = vadd.f32 0.0, %v213
    %215 = vdwg.mxu0
    %v216 = vld [vmem:[%s2] sm:$0x1]
    %v217 = vld [vmem:[%s3] sm:$0x1]
    %v218 = vadd.f32 %v159, %v161
    %v219 = vrot.slane %v218, 4
    %v220 = vadd.f32 %v218, %v219
    %v221 = vrot.slane %v220, 2
    %v222 = vadd.f32 %v220, %v221
    %v223 = vrot.slane %v222, 1
    %v224 = vadd.f32 %v222, %v223
    %v225 = vadd.f32 %v173, %v175
    %v226 = vrot.slane %v225, 4
    %v227 = vadd.f32 %v225, %v226
    %v228 = vrot.slane %v227, 2
    %v229 = vadd.f32 %v227, %v228
    %v230 = vrot.slane %v229, 1
    %v231 = vadd.f32 %v229, %v230
    %v232 = vadd.f32 %v224, 0.0
    %v233 = vadd.f32 %v231, 0.0
    %v234 = vmul.f32 %v159, %v159
    %v235 = vmul.f32 %v173, %v173
    %v236 = vmul.f32 %v161, %v161
    %v237 = vmul.f32 %v175, %v175
    %v238 = vadd.f32 %v234, %v236
    %v239 = vrot.slane %v238, 4
    %v240 = vadd.f32 %v238, %v239
    %v241 = vrot.slane %v240, 2
    %v242 = vadd.f32 %v240, %v241
    %v243 = vrot.slane %v242, 1
    %v244 = vadd.f32 %v242, %v243
    %v245 = vadd.f32 %v235, %v237
    %v246 = vrot.slane %v245, 4
    %v247 = vadd.f32 %v245, %v246
    %v248 = vrot.slane %v247, 2
    %v249 = vadd.f32 %v247, %v248
    %v250 = vrot.slane %v249, 1
    %v251 = vadd.f32 %v249, %v250
    %v252 = vadd.f32 %v244, 0.0
    %v253 = vadd.f32 %v251, 0.0
    %v254 = vadd.f32 %v198, %v200
    %v255 = vrot.slane %v254, 4
    %v256 = vadd.f32 %v254, %v255
    %v257 = vrot.slane %v256, 2
    %v258 = vadd.f32 %v256, %v257
    %v259 = vrot.slane %v258, 1
    %v260 = vadd.f32 %v258, %v259
    %v261 = vadd.f32 %v212, %v214
    %v262 = vrot.slane %v261, 4
    %v263 = vadd.f32 %v261, %v262
    %v264 = vrot.slane %v263, 2
    %v265 = vadd.f32 %v263, %v264
    %v266 = vrot.slane %v265, 1
    %v267 = vadd.f32 %v265, %v266
    %v268 = vadd.f32 %v232, %v260
    %v269 = vadd.f32 %v233, %v267
    %v270 = vmul.f32 %v198, %v198
    %v271 = vmul.f32 %v212, %v212
    %v272 = vmul.f32 %v200, %v200
    %v273 = vmul.f32 %v214, %v214
    %v274 = vadd.f32 %v270, %v272
    %v275 = vrot.slane %v274, 4
    %v276 = vadd.f32 %v274, %v275
    %v277 = vrot.slane %v276, 2
    %v278 = vadd.f32 %v276, %v277
    %v279 = vrot.slane %v278, 1
    %v280 = vadd.f32 %v278, %v279
    %v281 = vadd.f32 %v271, %v273
    %v282 = vrot.slane %v281, 4
    %v283 = vadd.f32 %v281, %v282
    %v284 = vrot.slane %v283, 2
    %v285 = vadd.f32 %v283, %v284
    %v286 = vrot.slane %v285, 1
    %v287 = vadd.f32 %v285, %v286
    %v288 = vadd.f32 %v252, %v280
    %v289 = vadd.f32 %v253, %v287
    %v290 = vadd.f32 %v268, 0.0
    %v291 = vadd.f32 %v288, 0.0
    %293 = vrot.lane.b32.xlu0 %v268, 112
    %v294 = vpop.permute.xlu0 %293
    %v296 = vadd.f32 %v290, %v294
    %298 = vrot.lane.b32.xlu0 %v288, 112
    %v299 = vpop.permute.xlu0 %298
    %v301 = vadd.f32 %v291, %v299
    %302 = vrot.lane.b32.xlu0 %v268, 96
    %v303 = vpop.permute.xlu0 %302
    %v305 = vadd.f32 %v296, %v303
    %306 = vrot.lane.b32.xlu0 %v288, 96
    %v307 = vpop.permute.xlu0 %306
    %v309 = vadd.f32 %v301, %v307
    %310 = vrot.lane.b32.xlu0 %v268, 80
    %v311 = vpop.permute.xlu0 %310
    %v313 = vadd.f32 %v305, %v311
    %314 = vrot.lane.b32.xlu0 %v288, 80
    %v315 = vpop.permute.xlu0 %314
    %v317 = vadd.f32 %v309, %v315
    %318 = vrot.lane.b32.xlu0 %v268, 64
    %v319 = vpop.permute.xlu0 %318
    %v321 = vadd.f32 %v313, %v319
    %322 = vrot.lane.b32.xlu0 %v288, 64
    %v323 = vpop.permute.xlu0 %322
    %v325 = vadd.f32 %v317, %v323
    %326 = vrot.lane.b32.xlu0 %v268, 48
    %v327 = vpop.permute.xlu0 %326
    %v329 = vadd.f32 %v321, %v327
    %330 = vrot.lane.b32.xlu0 %v288, 48
    %v331 = vpop.permute.xlu0 %330
    %v333 = vadd.f32 %v325, %v331
    %334 = vrot.lane.b32.xlu0 %v268, 32
    %v335 = vpop.permute.xlu0 %334
    %v337 = vadd.f32 %v329, %v335
    %338 = vrot.lane.b32.xlu0 %v288, 32
    %v339 = vpop.permute.xlu0 %338
    %v341 = vadd.f32 %v333, %v339
    %342 = vrot.lane.b32.xlu0 %v268, 16
    %v343 = vpop.permute.xlu0 %342
    %v345 = vadd.f32 %v337, %v343
    %346 = vrot.lane.b32.xlu0 %v288, 16
    %v347 = vpop.permute.xlu0 %346
    %v349 = vadd.f32 %v341, %v347
    %v350 = vadd.f32 %v345, %v269
    %v351 = vadd.f32 %v349, %v289
    %353 = vrot.lane.b32.xlu0 %v269, 112
    %v354 = vpop.permute.xlu0 %353
    %v356 = vadd.f32 %v350, %v354
    %358 = vrot.lane.b32.xlu0 %v289, 112
    %v359 = vpop.permute.xlu0 %358
    %v361 = vadd.f32 %v351, %v359
    %362 = vrot.lane.b32.xlu0 %v269, 96
    %v363 = vpop.permute.xlu0 %362
    %v365 = vadd.f32 %v356, %v363
    %366 = vrot.lane.b32.xlu0 %v289, 96
    %v367 = vpop.permute.xlu0 %366
    %v369 = vadd.f32 %v361, %v367
    %370 = vrot.lane.b32.xlu0 %v269, 80
    %v371 = vpop.permute.xlu0 %370
    %v373 = vadd.f32 %v365, %v371
    %374 = vrot.lane.b32.xlu0 %v289, 80
    %v375 = vpop.permute.xlu0 %374
    %v377 = vadd.f32 %v369, %v375
    %378 = vrot.lane.b32.xlu0 %v269, 64
    %v379 = vpop.permute.xlu0 %378
    %v381 = vadd.f32 %v373, %v379
    %382 = vrot.lane.b32.xlu0 %v289, 64
    %v383 = vpop.permute.xlu0 %382
    %v385 = vadd.f32 %v377, %v383
    %386 = vrot.lane.b32.xlu0 %v269, 48
    %v387 = vpop.permute.xlu0 %386
    %v389 = vadd.f32 %v381, %v387
    %390 = vrot.lane.b32.xlu0 %v289, 48
    %v391 = vpop.permute.xlu0 %390
    %v393 = vadd.f32 %v385, %v391
    %394 = vrot.lane.b32.xlu0 %v269, 32
    %v395 = vpop.permute.xlu0 %394
    %v397 = vadd.f32 %v389, %v395
    %398 = vrot.lane.b32.xlu0 %v289, 32
    %v399 = vpop.permute.xlu0 %398
    %v401 = vadd.f32 %v393, %v399
    %402 = vrot.lane.b32.xlu0 %v269, 16
    %v403 = vpop.permute.xlu0 %402
    %v405 = vadd.f32 %v397, %v403
    %406 = vrot.lane.b32.xlu0 %v289, 16
    %v407 = vpop.permute.xlu0 %406
    %v409 = vadd.f32 %v401, %v407
    %v410 = vmul.f32 %v405, 0.001953125
    %v411 = vmul.f32 %v409, 0.001953125
    %v412 = vmul.f32 %v410, %v410
    %v413 = vsub.f32 %v411, %v412
    %v414 = vmax.f32 %v413, 0.0
    %v415 = vadd.f32 %v414, 1e-05
    %v416 = vrsqrt.pop %v415
    %v417 = vmul.f32 %v416, %v415
    %v418 = vmul.f32 %v417, %v416
    %v419 = vmul.f32 0.5, %v418
    %v420 = vsub.f32 1.5, %v419
    %v421 = vmul.f32 %v416, %v420
    %vm422 = vweird.f32 %v415
    %vm423 = vweird.f32 %v416
    %vm424 = vmor %vm422, %vm423
    %v425 = vsel %vm424, %v416, %v421
    %v426 = vmul.f32 %v216, %v425
    %v427 = vmul.f32 %v410, %v426
    %v428 = vsub.f32 %v217, %v427
    %v430 = vperm.slane %v426, 0
    %431 = vrot.lane.b32.xlu0 %v430, 16
    %v432 = vpop.permute.xlu0 %431
    %434 = vrot.lane.b32.xlu0 %v430, 32
    %v435 = vpop.permute.xlu0 %434
    %437 = vrot.lane.b32.xlu0 %v430, 48
    %v438 = vpop.permute.xlu0 %437
    %440 = vrot.lane.b32.xlu0 %v430, 64
    %v441 = vpop.permute.xlu0 %440
    %443 = vrot.lane.b32.xlu0 %v430, 80
    %v444 = vpop.permute.xlu0 %443
    %446 = vrot.lane.b32.xlu0 %v430, 96
    %v447 = vpop.permute.xlu0 %446
    %449 = vrot.lane.b32.xlu0 %v430, 112
    %v450 = vpop.permute.xlu0 %449
    %vm452 = vcmask 130048
    %v453 = vsel %vm452, %v426, %v432
    %vm454 = vcmask 261120
    %v455 = vsel %vm454, %v453, %v435
    %vm456 = vcmask 392192
    %v457 = vsel %vm456, %v455, %v438
    %vm458 = vcmask 523264
    %v459 = vsel %vm458, %v457, %v441
    %vm460 = vcmask 654336
    %v461 = vsel %vm460, %v459, %v444
    %vm462 = vcmask 785408
    %v463 = vsel %vm462, %v461, %v447
    %vm464 = vcmask 916480
    %v465 = vsel %vm464, %v463, %v450
    %v467 = vperm.slane %v428, 0
    %468 = vrot.lane.b32.xlu0 %v467, 16
    %v469 = vpop.permute.xlu0 %468
    %471 = vrot.lane.b32.xlu0 %v467, 32
    %v472 = vpop.permute.xlu0 %471
    %474 = vrot.lane.b32.xlu0 %v467, 48
    %v475 = vpop.permute.xlu0 %474
    %477 = vrot.lane.b32.xlu0 %v467, 64
    %v478 = vpop.permute.xlu0 %477
    %480 = vrot.lane.b32.xlu0 %v467, 80
    %v481 = vpop.permute.xlu0 %480
    %483 = vrot.lane.b32.xlu0 %v467, 96
    %v484 = vpop.permute.xlu0 %483
    %486 = vrot.lane.b32.xlu0 %v467, 112
    %v487 = vpop.permute.xlu0 %486
    %v489 = vsel %vm452, %v428, %v469
    %v490 = vsel %vm454, %v489, %v472
    %v491 = vsel %vm456, %v490, %v475
    %v492 = vsel %vm458, %v491, %v478
    %v493 = vsel %vm460, %v492, %v481
    %v494 = vsel %vm462, %v493, %v484
    %v495 = vsel %vm464, %v494, %v487
    %v496 = vperm.slane %v465, 0
    %v497 = vmul.f32 %v159, %v496
    %v498 = vmul.f32 %v173, %v496
    %v499 = vmul.f32 %v161, %v496
    %v500 = vmul.f32 %v175, %v496
    %v501 = vperm.slane %v495, 0
    %v502 = vadd.f32 %v497, %v501
    %v503 = vadd.f32 %v498, %v501
    %v504 = vadd.f32 %v499, %v501
    %v505 = vadd.f32 %v500, %v501
    %v506 = vmax.f32 %v502, 0.0
    %v507 = vmax.f32 %v503, 0.0
    %v508 = vmax.f32 %v504, 0.0
    %v509 = vmax.f32 %v505, 0.0
    %v510 = vmax.f32 %v506, %v507
    %v511 = vmax.f32 %v508, %v509
    %v512 = vmul.f32 %v198, %v496
    %v513 = vmul.f32 %v212, %v496
    %v514 = vmul.f32 %v200, %v496
    %v515 = vmul.f32 %v214, %v496
    %v516 = vadd.f32 %v512, %v501
    %v517 = vadd.f32 %v513, %v501
    %v518 = vadd.f32 %v514, %v501
    %v519 = vadd.f32 %v515, %v501
    %v520 = vmax.f32 %v516, 0.0
    %v521 = vmax.f32 %v517, 0.0
    %v522 = vmax.f32 %v518, 0.0
    %v523 = vmax.f32 %v519, 0.0
    %v524 = vmax.f32 %v520, %v521
    %v525 = vmax.f32 %v522, %v523
    %v526 = vmax.f32 %v510, %v524
    %v527 = vmax.f32 %v511, %v525
    %v528 = vpack.c.bf16 %v527, %v526
    %v529 = vld [vmem:[%s4] sm:$0xff]
    %v530 = vld [vmem:[%s4 + $0x8] sm:$0xff]
    %v531 = vld [vmem:[%s4 + $0x10] sm:$0xff]
    %v532 = vld [vmem:[%s4 + $0x18] sm:$0xff]
    %v533 = vld [vmem:[%s4 + $0x20] sm:$0xff]
    %v534 = vld [vmem:[%s4 + $0x28] sm:$0xff]
    %v535 = vld [vmem:[%s4 + $0x30] sm:$0xff]
    %v536 = vld [vmem:[%s4 + $0x38] sm:$0xff]
    %v537 = vld [vmem:[%s4 + $0x40] sm:$0xff]
    %v538 = vld [vmem:[%s4 + $0x48] sm:$0xff]
    %v539 = vld [vmem:[%s4 + $0x50] sm:$0xff]
    %v540 = vld [vmem:[%s4 + $0x58] sm:$0xff]
    %v541 = vld [vmem:[%s4 + $0x60] sm:$0xff]
    %v542 = vld [vmem:[%s4 + $0x68] sm:$0xff]
    %v543 = vld [vmem:[%s4 + $0x70] sm:$0xff]
    %v544 = vld [vmem:[%s4 + $0x78] sm:$0xff]
    %v561 = vunpack.c.l.b16 %v529
    %v562 = vunpack.c.h.b16 %v529
    %v563 = vunpack.c.l.b16 %v530
    %v564 = vunpack.c.h.b16 %v530
    %v565 = vunpack.c.l.b16 %v531
    %v566 = vunpack.c.h.b16 %v531
    %v567 = vunpack.c.l.b16 %v532
    %v568 = vunpack.c.h.b16 %v532
    %v569 = vunpack.c.l.b16 %v533
    %v570 = vunpack.c.h.b16 %v533
    %v571 = vunpack.c.l.b16 %v534
    %v572 = vunpack.c.h.b16 %v534
    %v573 = vunpack.c.l.b16 %v535
    %v574 = vunpack.c.h.b16 %v535
    %v575 = vunpack.c.l.b16 %v536
    %v576 = vunpack.c.h.b16 %v536
    %v577 = vunpack.c.l.b16 %v537
    %v578 = vunpack.c.h.b16 %v537
    %v579 = vunpack.c.l.b16 %v538
    %v580 = vunpack.c.h.b16 %v538
    %v581 = vunpack.c.l.b16 %v539
    %v582 = vunpack.c.h.b16 %v539
    %v583 = vunpack.c.l.b16 %v540
    %v584 = vunpack.c.h.b16 %v540
    %v585 = vunpack.c.l.b16 %v541
    %v586 = vunpack.c.h.b16 %v541
    %v587 = vunpack.c.l.b16 %v542
    %v588 = vunpack.c.h.b16 %v542
    %v589 = vunpack.c.l.b16 %v543
    %v590 = vunpack.c.h.b16 %v543
    %v591 = vunpack.c.l.b16 %v544
    %v592 = vunpack.c.h.b16 %v544
    %v593 = vpack.c.b16 %v563, %v561
    %v594 = vpack.c.b16 %v564, %v562
    %v595 = vpack.c.b16 %v567, %v565
    %v596 = vpack.c.b16 %v568, %v566
    %v597 = vpack.c.b16 %v571, %v569
    %v598 = vpack.c.b16 %v572, %v570
    %v599 = vpack.c.b16 %v575, %v573
    %v600 = vpack.c.b16 %v576, %v574
    %v601 = vpack.c.b16 %v579, %v577
    %v602 = vpack.c.b16 %v580, %v578
    %v603 = vpack.c.b16 %v583, %v581
    %v604 = vpack.c.b16 %v584, %v582
    %v605 = vpack.c.b16 %v587, %v585
    %v606 = vpack.c.b16 %v588, %v586
    %v607 = vpack.c.b16 %v591, %v589
    %v608 = vpack.c.b16 %v592, %v590
    %625 = vmatpush.bf16.msra.mxu0 %v607
    %626 = vmatpush.bf16.msra.mxu0 %v605
    %627 = vmatpush.bf16.msra.mxu0 %v603
    %628 = vmatpush.bf16.msra.mxu0 %v601
    %629 = vmatpush.bf16.msra.mxu0 %v599
    %630 = vmatpush.bf16.msra.mxu0 %v597
    %631 = vmatpush.bf16.msra.mxu0 %v595
    %632 = vmatpush.bf16.msra.mxu0 %v593
    %633 = vmatmul.bf16.gmra.mxu0 %v528
    %v634 = vpop.f32.mrf.mxu0
    %v635 = vadd.f32 0.0, %v634
    %v636 = vpop.f32.mrf.mxu0
    %v637 = vadd.f32 0.0, %v636
    %638 = vdwg.mxu0
    %639 = vmatpush.bf16.msra.mxu0 %v608
    %640 = vmatpush.bf16.msra.mxu0 %v606
    %641 = vmatpush.bf16.msra.mxu0 %v604
    %642 = vmatpush.bf16.msra.mxu0 %v602
    %643 = vmatpush.bf16.msra.mxu0 %v600
    %644 = vmatpush.bf16.msra.mxu0 %v598
    %645 = vmatpush.bf16.msra.mxu0 %v596
    %646 = vmatpush.bf16.msra.mxu0 %v594
    %647 = vmatmul.bf16.gmra.mxu0 %v528
    %v648 = vpop.f32.mrf.mxu0
    %v649 = vadd.f32 0.0, %v648
    %v650 = vpop.f32.mrf.mxu0
    %v651 = vadd.f32 0.0, %v650
    %652 = vdwg.mxu0
    %v655 = vrot.slane %v635, 7
    %v656 = vrot.slane %v649, 7
    %vm659 = vcmask 1040384
    %v660 = vsel %vm659, 0.0, %v655
    %v661 = vsel %vm659, 0.0, %v656
    %vm662 = vcmask 1044480
    %v663 = vsel %vm662, %v660, 0.0
    %v664 = vsel %vm662, %v661, 0.0
    %v665 = vrot.slane %v635, 3
    %v666 = vrot.slane %v649, 3
    %v669 = vsel %vm659, 0.0, %v665
    %v670 = vsel %vm659, 0.0, %v666
    %v671 = vsel %vm662, %v669, 0.0
    %v672 = vsel %vm662, %v670, 0.0
    %v675 = vrot.slane %v637, 7
    %v676 = vrot.slane %v651, 7
    %v679 = vsel %vm659, 0.0, %v675
    %v680 = vsel %vm659, 0.0, %v676
    %v681 = vsel %vm662, %v679, 0.0
    %v682 = vsel %vm662, %v680, 0.0
    %v683 = vrot.slane %v637, 3
    %v684 = vrot.slane %v651, 3
    %v687 = vsel %vm659, 0.0, %v683
    %v688 = vsel %vm659, 0.0, %v684
    %v689 = vsel %vm662, %v687, 0.0
    %v690 = vsel %vm662, %v688, 0.0
    %v691 = vld [vmem:[#allocation2] sm:$0xff]
    %v692 = vld [vmem:[#allocation2 + $0x8] sm:$0xff]
    %v693 = vld [vmem:[#allocation2 + $0x10] sm:$0xff]
    %v694 = vld [vmem:[#allocation2 + $0x18] sm:$0xff]
    %v695 = vld [vmem:[#allocation2 + $0x20] sm:$0xff]
    %v696 = vld [vmem:[#allocation2 + $0x28] sm:$0xff]
    %v697 = vld [vmem:[#allocation2 + $0x30] sm:$0xff]
    %v698 = vld [vmem:[#allocation2 + $0x38] sm:$0xff]
    %v699 = vld [vmem:[#allocation2 + $0x40] sm:$0xff]
    %v700 = vld [vmem:[#allocation2 + $0x48] sm:$0xff]
    %v701 = vld [vmem:[#allocation2 + $0x50] sm:$0xff]
    %v702 = vld [vmem:[#allocation2 + $0x58] sm:$0xff]
    %v703 = vld [vmem:[#allocation2 + $0x60] sm:$0xff]
    %v704 = vld [vmem:[#allocation2 + $0x68] sm:$0xff]
    %v705 = vld [vmem:[#allocation2 + $0x70] sm:$0xff]
    %v706 = vld [vmem:[#allocation2 + $0x78] sm:$0xff]
    %v707 = vld [vmem:[#allocation2 + $0x80] sm:$0xff]
    %v708 = vld [vmem:[#allocation2 + $0x88] sm:$0xff]
    %v709 = vld [vmem:[#allocation2 + $0x90] sm:$0xff]
    %v710 = vld [vmem:[#allocation2 + $0x98] sm:$0xff]
    %v711 = vld [vmem:[#allocation2 + $0xa0] sm:$0xff]
    %v712 = vld [vmem:[#allocation2 + $0xa8] sm:$0xff]
    %v713 = vld [vmem:[#allocation2 + $0xb0] sm:$0xff]
    %v714 = vld [vmem:[#allocation2 + $0xb8] sm:$0xff]
    %v715 = vld [vmem:[#allocation2 + $0xc0] sm:$0xff]
    %v716 = vld [vmem:[#allocation2 + $0xc8] sm:$0xff]
    %v717 = vld [vmem:[#allocation2 + $0xd0] sm:$0xff]
    %v718 = vld [vmem:[#allocation2 + $0xd8] sm:$0xff]
    %v719 = vld [vmem:[#allocation2 + $0xe0] sm:$0xff]
    %v720 = vld [vmem:[#allocation2 + $0xe8] sm:$0xff]
    %v721 = vld [vmem:[#allocation2 + $0xf0] sm:$0xff]
    %v722 = vld [vmem:[#allocation2 + $0xf8] sm:$0xff]
    %v723 = vld [vmem:[#allocation2 + $0x100] sm:$0xff]
    %v724 = vld [vmem:[#allocation2 + $0x108] sm:$0xff]
    %v725 = vld [vmem:[#allocation2 + $0x110] sm:$0xff]
    %v726 = vld [vmem:[#allocation2 + $0x118] sm:$0xff]
    %v727 = vld [vmem:[#allocation2 + $0x120] sm:$0xff]
    %v728 = vld [vmem:[#allocation2 + $0x128] sm:$0xff]
    %v729 = vld [vmem:[#allocation2 + $0x130] sm:$0xff]
    %v730 = vld [vmem:[#allocation2 + $0x138] sm:$0xff]
    %v731 = vld [vmem:[#allocation2 + $0x140] sm:$0xff]
    %v732 = vld [vmem:[#allocation2 + $0x148] sm:$0xff]
    %v733 = vld [vmem:[#allocation2 + $0x150] sm:$0xff]
    %v734 = vld [vmem:[#allocation2 + $0x158] sm:$0xff]
    %v735 = vld [vmem:[#allocation2 + $0x160] sm:$0xff]
    %v736 = vld [vmem:[#allocation2 + $0x168] sm:$0xff]
    %v737 = vld [vmem:[#allocation2 + $0x170] sm:$0xff]
    %v738 = vld [vmem:[#allocation2 + $0x178] sm:$0xff]
    %v739 = vld [vmem:[#allocation2 + $0x180] sm:$0xff]
    %v740 = vld [vmem:[#allocation2 + $0x188] sm:$0xff]
    %v741 = vld [vmem:[#allocation2 + $0x190] sm:$0xff]
    %v742 = vld [vmem:[#allocation2 + $0x198] sm:$0xff]
    %v743 = vld [vmem:[#allocation2 + $0x1a0] sm:$0xff]
    %v744 = vld [vmem:[#allocation2 + $0x1a8] sm:$0xff]
    %v745 = vld [vmem:[#allocation2 + $0x1b0] sm:$0xff]
    %v746 = vld [vmem:[#allocation2 + $0x1b8] sm:$0xff]
    %v747 = vld [vmem:[#allocation2 + $0x1c0] sm:$0xff]
    %v748 = vld [vmem:[#allocation2 + $0x1c8] sm:$0xff]
    %v749 = vld [vmem:[#allocation2 + $0x1d0] sm:$0xff]
    %v750 = vld [vmem:[#allocation2 + $0x1d8] sm:$0xff]
    %v751 = vld [vmem:[#allocation2 + $0x1e0] sm:$0xff]
    %v752 = vld [vmem:[#allocation2 + $0x1e8] sm:$0xff]
    %v753 = vld [vmem:[#allocation2 + $0x1f0] sm:$0xff]
    %v754 = vld [vmem:[#allocation2 + $0x1f8] sm:$0xff]
    %v755 = vld [vmem:[#allocation2 + $0x200] sm:$0xff]
    %v756 = vld [vmem:[#allocation2 + $0x208] sm:$0xff]
    %v757 = vld [vmem:[#allocation2 + $0x210] sm:$0xff]
    %v758 = vld [vmem:[#allocation2 + $0x218] sm:$0xff]
    %v759 = vld [vmem:[#allocation2 + $0x220] sm:$0xff]
    %v760 = vld [vmem:[#allocation2 + $0x228] sm:$0xff]
    %v761 = vld [vmem:[#allocation2 + $0x230] sm:$0xff]
    %v762 = vld [vmem:[#allocation2 + $0x238] sm:$0xff]
    %v763 = vld [vmem:[#allocation2 + $0x240] sm:$0xff]
    %v764 = vld [vmem:[#allocation2 + $0x248] sm:$0xff]
    %v765 = vld [vmem:[#allocation2 + $0x250] sm:$0xff]
    %v766 = vld [vmem:[#allocation2 + $0x258] sm:$0xff]
    %v767 = vld [vmem:[#allocation2 + $0x260] sm:$0xff]
    %v768 = vld [vmem:[#allocation2 + $0x268] sm:$0xff]
    %v769 = vld [vmem:[#allocation2 + $0x270] sm:$0xff]
    %v770 = vld [vmem:[#allocation2 + $0x278] sm:$0xff]
    %v771 = vld [vmem:[#allocation2 + $0x280] sm:$0xff]
    %v772 = vld [vmem:[#allocation2 + $0x288] sm:$0xff]
    %v773 = vld [vmem:[#allocation2 + $0x290] sm:$0xff]
    %v774 = vld [vmem:[#allocation2 + $0x298] sm:$0xff]
    %v775 = vld [vmem:[#allocation2 + $0x2a0] sm:$0xff]
    %v776 = vld [vmem:[#allocation2 + $0x2a8] sm:$0xff]
    %v777 = vld [vmem:[#allocation2 + $0x2b0] sm:$0xff]
    %v778 = vld [vmem:[#allocation2 + $0x2b8] sm:$0xff]
    %v779 = vld [vmem:[#allocation2 + $0x2c0] sm:$0xff]
    %v780 = vld [vmem:[#allocation2 + $0x2c8] sm:$0xff]
    %v781 = vld [vmem:[#allocation2 + $0x2d0] sm:$0xff]
    %v782 = vld [vmem:[#allocation2 + $0x2d8] sm:$0xff]
    %v783 = vld [vmem:[#allocation2 + $0x2e0] sm:$0xff]
    %v784 = vld [vmem:[#allocation2 + $0x2e8] sm:$0xff]
    %v785 = vld [vmem:[#allocation2 + $0x2f0] sm:$0xff]
    %v786 = vld [vmem:[#allocation2 + $0x2f8] sm:$0xff]
    %v787 = vld [vmem:[#allocation2 + $0x300] sm:$0xff]
    %v788 = vld [vmem:[#allocation2 + $0x308] sm:$0xff]
    %v789 = vld [vmem:[#allocation2 + $0x310] sm:$0xff]
    %v790 = vld [vmem:[#allocation2 + $0x318] sm:$0xff]
    %v791 = vld [vmem:[#allocation2 + $0x320] sm:$0xff]
    %v792 = vld [vmem:[#allocation2 + $0x328] sm:$0xff]
    %v793 = vld [vmem:[#allocation2 + $0x330] sm:$0xff]
    %v794 = vld [vmem:[#allocation2 + $0x338] sm:$0xff]
    %v795 = vld [vmem:[#allocation2 + $0x340] sm:$0xff]
    %v796 = vld [vmem:[#allocation2 + $0x348] sm:$0xff]
    %v797 = vld [vmem:[#allocation2 + $0x350] sm:$0xff]
    %v798 = vld [vmem:[#allocation2 + $0x358] sm:$0xff]
    %v799 = vld [vmem:[#allocation2 + $0x360] sm:$0xff]
    %v800 = vld [vmem:[#allocation2 + $0x368] sm:$0xff]
    %v801 = vld [vmem:[#allocation2 + $0x370] sm:$0xff]
    %v802 = vld [vmem:[#allocation2 + $0x378] sm:$0xff]
    %v803 = vld [vmem:[#allocation2 + $0x380] sm:$0xff]
    %v804 = vld [vmem:[#allocation2 + $0x388] sm:$0xff]
    %v805 = vld [vmem:[#allocation2 + $0x390] sm:$0xff]
    %v806 = vld [vmem:[#allocation2 + $0x398] sm:$0xff]
    %v807 = vld [vmem:[#allocation2 + $0x3a0] sm:$0xff]
    %v808 = vld [vmem:[#allocation2 + $0x3a8] sm:$0xff]
    %v809 = vld [vmem:[#allocation2 + $0x3b0] sm:$0xff]
    %v810 = vld [vmem:[#allocation2 + $0x3b8] sm:$0xff]
    %v811 = vld [vmem:[#allocation2 + $0x3c0] sm:$0xff]
    %v812 = vld [vmem:[#allocation2 + $0x3c8] sm:$0xff]
    %v813 = vld [vmem:[#allocation2 + $0x3d0] sm:$0xff]
    %v814 = vld [vmem:[#allocation2 + $0x3d8] sm:$0xff]
    %v815 = vld [vmem:[#allocation2 + $0x3e0] sm:$0xff]
    %v816 = vld [vmem:[#allocation2 + $0x3e8] sm:$0xff]
    %v817 = vld [vmem:[#allocation2 + $0x3f0] sm:$0xff]
    %v818 = vld [vmem:[#allocation2 + $0x3f8] sm:$0xff]
    %v819 = vld [vmem:[#allocation2 + $0x400] sm:$0xff]
    %v820 = vld [vmem:[#allocation2 + $0x408] sm:$0xff]
    %v821 = vld [vmem:[#allocation2 + $0x410] sm:$0xff]
    %v822 = vld [vmem:[#allocation2 + $0x418] sm:$0xff]
    %v823 = vld [vmem:[#allocation2 + $0x420] sm:$0xff]
    %v824 = vld [vmem:[#allocation2 + $0x428] sm:$0xff]
    %v825 = vld [vmem:[#allocation2 + $0x430] sm:$0xff]
    %v826 = vld [vmem:[#allocation2 + $0x438] sm:$0xff]
    %v827 = vld [vmem:[#allocation2 + $0x440] sm:$0xff]
    %v828 = vld [vmem:[#allocation2 + $0x448] sm:$0xff]
    %v829 = vld [vmem:[#allocation2 + $0x450] sm:$0xff]
    %v830 = vld [vmem:[#allocation2 + $0x458] sm:$0xff]
    %v831 = vld [vmem:[#allocation2 + $0x460] sm:$0xff]
    %v832 = vld [vmem:[#allocation2 + $0x468] sm:$0xff]
    %v833 = vld [vmem:[#allocation2 + $0x470] sm:$0xff]
    %v834 = vld [vmem:[#allocation2 + $0x478] sm:$0xff]
    %v835 = vld [vmem:[#allocation2 + $0x480] sm:$0xff]
    %v836 = vld [vmem:[#allocation2 + $0x488] sm:$0xff]
    %v837 = vld [vmem:[#allocation2 + $0x490] sm:$0xff]
    %v838 = vld [vmem:[#allocation2 + $0x498] sm:$0xff]
    %v839 = vld [vmem:[#allocation2 + $0x4a0] sm:$0xff]
    %v840 = vld [vmem:[#allocation2 + $0x4a8] sm:$0xff]
    %v841 = vld [vmem:[#allocation2 + $0x4b0] sm:$0xff]
    %v842 = vld [vmem:[#allocation2 + $0x4b8] sm:$0xff]
    %v843 = vld [vmem:[#allocation2 + $0x4c0] sm:$0xff]
    %v844 = vld [vmem:[#allocation2 + $0x4c8] sm:$0xff]
    %v845 = vld [vmem:[#allocation2 + $0x4d0] sm:$0xff]
    %v846 = vld [vmem:[#allocation2 + $0x4d8] sm:$0xff]
    %v847 = vld [vmem:[#allocation2 + $0x4e0] sm:$0xff]
    %v848 = vld [vmem:[#allocation2 + $0x4e8] sm:$0xff]
    %v849 = vld [vmem:[#allocation2 + $0x4f0] sm:$0xff]
    %v850 = vld [vmem:[#allocation2 + $0x4f8] sm:$0xff]
    %v853 = vrot.slane %v671, 4
    %v854 = vrot.slane %v672, 4
    %vm857 = vcmask 1043456
    %v858 = vsel %vm857, %v663, %v853
    %v859 = vsel %vm857, %v664, %v854
    %v862 = vrot.slane %v689, 4
    %v863 = vrot.slane %v690, 4
    %v866 = vsel %vm857, %v681, %v862
    %v867 = vsel %vm857, %v682, %v863
    %v870 = vrot.slane %v663, 1
    %v871 = vrot.slane %v664, 1
    %v874 = vrot.slane %v671, 5
    %v875 = vrot.slane %v672, 5
    %v878 = vsel %vm857, %v870, %v874
    %v879 = vsel %vm857, %v871, %v875
    %v882 = vrot.slane %v681, 1
    %v883 = vrot.slane %v682, 1
    %v886 = vrot.slane %v689, 5
    %v887 = vrot.slane %v690, 5
    %v890 = vsel %vm857, %v882, %v886
    %v891 = vsel %vm857, %v883, %v887
    %v892 = vrot.slane %v663, 2
    %v893 = vrot.slane %v664, 2
    %v896 = vrot.slane %v671, 6
    %v897 = vrot.slane %v672, 6
    %v900 = vsel %vm857, %v892, %v896
    %v901 = vsel %vm857, %v893, %v897
    %v902 = vpack.c.bf16 %v858, %v858
    %v903 = vpack.c.bf16 %v859, %v859
    %v904 = vpack.c.bf16 %v866, %v866
    %v905 = vpack.c.bf16 %v867, %v867
    %v906 = vpack.c.bf16 %v878, %v878
    %v907 = vpack.c.bf16 %v879, %v879
    %v908 = vpack.c.bf16 %v890, %v890
    %v909 = vpack.c.bf16 %v891, %v891
    %v910 = vpack.c.bf16 %v900, %v900
    %v911 = vpack.c.bf16 %v901, %v901
    %v1072 = vunpack.c.l.b16 %v691
    %v1073 = vunpack.c.h.b16 %v691
    %v1074 = vunpack.c.l.b16 %v692
    %v1075 = vunpack.c.h.b16 %v692
    %v1076 = vunpack.c.l.b16 %v693
    %v1077 = vunpack.c.h.b16 %v693
    %v1078 = vunpack.c.l.b16 %v694
    %v1079 = vunpack.c.h.b16 %v694
    %v1080 = vunpack.c.l.b16 %v695
    %v1081 = vunpack.c.h.b16 %v695
    %v1082 = vunpack.c.l.b16 %v696
    %v1083 = vunpack.c.h.b16 %v696
    %v1084 = vunpack.c.l.b16 %v697
    %v1085 = vunpack.c.h.b16 %v697
    %v1086 = vunpack.c.l.b16 %v698
    %v1087 = vunpack.c.h.b16 %v698
    %v1088 = vunpack.c.l.b16 %v699
    %v1089 = vunpack.c.h.b16 %v699
    %v1090 = vunpack.c.l.b16 %v700
    %v1091 = vunpack.c.h.b16 %v700
    %v1092 = vunpack.c.l.b16 %v701
    %v1093 = vunpack.c.h.b16 %v701
    %v1094 = vunpack.c.l.b16 %v702
    %v1095 = vunpack.c.h.b16 %v702
    %v1096 = vunpack.c.l.b16 %v703
    %v1097 = vunpack.c.h.b16 %v703
    %v1098 = vunpack.c.l.b16 %v704
    %v1099 = vunpack.c.h.b16 %v704
    %v1100 = vunpack.c.l.b16 %v705
    %v1101 = vunpack.c.h.b16 %v705
    %v1102 = vunpack.c.l.b16 %v706
    %v1103 = vunpack.c.h.b16 %v706
    %v1104 = vunpack.c.l.b16 %v707
    %v1105 = vunpack.c.h.b16 %v707
    %v1106 = vunpack.c.l.b16 %v708
    %v1107 = vunpack.c.h.b16 %v708
    %v1108 = vunpack.c.l.b16 %v709
    %v1109 = vunpack.c.h.b16 %v709
    %v1110 = vunpack.c.l.b16 %v710
    %v1111 = vunpack.c.h.b16 %v710
    %v1112 = vunpack.c.l.b16 %v711
    %v1113 = vunpack.c.h.b16 %v711
    %v1114 = vunpack.c.l.b16 %v712
    %v1115 = vunpack.c.h.b16 %v712
    %v1116 = vunpack.c.l.b16 %v713
    %v1117 = vunpack.c.h.b16 %v713
    %v1118 = vunpack.c.l.b16 %v714
    %v1119 = vunpack.c.h.b16 %v714
    %v1120 = vunpack.c.l.b16 %v715
    %v1121 = vunpack.c.h.b16 %v715
    %v1122 = vunpack.c.l.b16 %v716
    %v1123 = vunpack.c.h.b16 %v716
    %v1124 = vunpack.c.l.b16 %v717
    %v1125 = vunpack.c.h.b16 %v717
    %v1126 = vunpack.c.l.b16 %v718
    %v1127 = vunpack.c.h.b16 %v718
    %v1128 = vunpack.c.l.b16 %v719
    %v1129 = vunpack.c.h.b16 %v719
    %v1130 = vunpack.c.l.b16 %v720
    %v1131 = vunpack.c.h.b16 %v720
    %v1132 = vunpack.c.l.b16 %v721
    %v1133 = vunpack.c.h.b16 %v721
    %v1134 = vunpack.c.l.b16 %v722
    %v1135 = vunpack.c.h.b16 %v722
    %v1136 = vunpack.c.l.b16 %v723
    %v1137 = vunpack.c.h.b16 %v723
    %v1138 = vunpack.c.l.b16 %v724
    %v1139 = vunpack.c.h.b16 %v724
    %v1140 = vunpack.c.l.b16 %v725
    %v1141 = vunpack.c.h.b16 %v725
    %v1142 = vunpack.c.l.b16 %v726
    %v1143 = vunpack.c.h.b16 %v726
    %v1144 = vunpack.c.l.b16 %v727
    %v1145 = vunpack.c.h.b16 %v727
    %v1146 = vunpack.c.l.b16 %v728
    %v1147 = vunpack.c.h.b16 %v728
    %v1148 = vunpack.c.l.b16 %v729
    %v1149 = vunpack.c.h.b16 %v729
    %v1150 = vunpack.c.l.b16 %v730
    %v1151 = vunpack.c.h.b16 %v730
    %v1152 = vunpack.c.l.b16 %v731
    %v1153 = vunpack.c.h.b16 %v731
    %v1154 = vunpack.c.l.b16 %v732
    %v1155 = vunpack.c.h.b16 %v732
    %v1156 = vunpack.c.l.b16 %v733
    %v1157 = vunpack.c.h.b16 %v733
    %v1158 = vunpack.c.l.b16 %v734
    %v1159 = vunpack.c.h.b16 %v734
    %v1160 = vunpack.c.l.b16 %v735
    %v1161 = vunpack.c.h.b16 %v735
    %v1162 = vunpack.c.l.b16 %v736
    %v1163 = vunpack.c.h.b16 %v736
    %v1164 = vunpack.c.l.b16 %v737
    %v1165 = vunpack.c.h.b16 %v737
    %v1166 = vunpack.c.l.b16 %v738
    %v1167 = vunpack.c.h.b16 %v738
    %v1168 = vunpack.c.l.b16 %v739
    %v1169 = vunpack.c.h.b16 %v739
    %v1170 = vunpack.c.l.b16 %v740
    %v1171 = vunpack.c.h.b16 %v740
    %v1172 = vunpack.c.l.b16 %v741
    %v1173 = vunpack.c.h.b16 %v741
    %v1174 = vunpack.c.l.b16 %v742
    %v1175 = vunpack.c.h.b16 %v742
    %v1176 = vunpack.c.l.b16 %v743
    %v1177 = vunpack.c.h.b16 %v743
    %v1178 = vunpack.c.l.b16 %v744
    %v1179 = vunpack.c.h.b16 %v744
    %v1180 = vunpack.c.l.b16 %v745
    %v1181 = vunpack.c.h.b16 %v745
    %v1182 = vunpack.c.l.b16 %v746
    %v1183 = vunpack.c.h.b16 %v746
    %v1184 = vunpack.c.l.b16 %v747
    %v1185 = vunpack.c.h.b16 %v747
    %v1186 = vunpack.c.l.b16 %v748
    %v1187 = vunpack.c.h.b16 %v748
    %v1188 = vunpack.c.l.b16 %v749
    %v1189 = vunpack.c.h.b16 %v749
    %v1190 = vunpack.c.l.b16 %v750
    %v1191 = vunpack.c.h.b16 %v750
    %v1192 = vunpack.c.l.b16 %v751
    %v1193 = vunpack.c.h.b16 %v751
    %v1194 = vunpack.c.l.b16 %v752
    %v1195 = vunpack.c.h.b16 %v752
    %v1196 = vunpack.c.l.b16 %v753
    %v1197 = vunpack.c.h.b16 %v753
    %v1198 = vunpack.c.l.b16 %v754
    %v1199 = vunpack.c.h.b16 %v754
    %v1200 = vunpack.c.l.b16 %v755
    %v1201 = vunpack.c.h.b16 %v755
    %v1202 = vunpack.c.l.b16 %v756
    %v1203 = vunpack.c.h.b16 %v756
    %v1204 = vunpack.c.l.b16 %v757
    %v1205 = vunpack.c.h.b16 %v757
    %v1206 = vunpack.c.l.b16 %v758
    %v1207 = vunpack.c.h.b16 %v758
    %v1208 = vunpack.c.l.b16 %v759
    %v1209 = vunpack.c.h.b16 %v759
    %v1210 = vunpack.c.l.b16 %v760
    %v1211 = vunpack.c.h.b16 %v760
    %v1212 = vunpack.c.l.b16 %v761
    %v1213 = vunpack.c.h.b16 %v761
    %v1214 = vunpack.c.l.b16 %v762
    %v1215 = vunpack.c.h.b16 %v762
    %v1216 = vunpack.c.l.b16 %v763
    %v1217 = vunpack.c.h.b16 %v763
    %v1218 = vunpack.c.l.b16 %v764
    %v1219 = vunpack.c.h.b16 %v764
    %v1220 = vunpack.c.l.b16 %v765
    %v1221 = vunpack.c.h.b16 %v765
    %v1222 = vunpack.c.l.b16 %v766
    %v1223 = vunpack.c.h.b16 %v766
    %v1224 = vunpack.c.l.b16 %v767
    %v1225 = vunpack.c.h.b16 %v767
    %v1226 = vunpack.c.l.b16 %v768
    %v1227 = vunpack.c.h.b16 %v768
    %v1228 = vunpack.c.l.b16 %v769
    %v1229 = vunpack.c.h.b16 %v769
    %v1230 = vunpack.c.l.b16 %v770
    %v1231 = vunpack.c.h.b16 %v770
    %v1232 = vunpack.c.l.b16 %v771
    %v1233 = vunpack.c.h.b16 %v771
    %v1234 = vunpack.c.l.b16 %v772
    %v1235 = vunpack.c.h.b16 %v772
    %v1236 = vunpack.c.l.b16 %v773
    %v1237 = vunpack.c.h.b16 %v773
    %v1238 = vunpack.c.l.b16 %v774
    %v1239 = vunpack.c.h.b16 %v774
    %v1240 = vunpack.c.l.b16 %v775
    %v1241 = vunpack.c.h.b16 %v775
    %v1242 = vunpack.c.l.b16 %v776
    %v1243 = vunpack.c.h.b16 %v776
    %v1244 = vunpack.c.l.b16 %v777
    %v1245 = vunpack.c.h.b16 %v777
    %v1246 = vunpack.c.l.b16 %v778
    %v1247 = vunpack.c.h.b16 %v778
    %v1248 = vunpack.c.l.b16 %v779
    %v1249 = vunpack.c.h.b16 %v779
    %v1250 = vunpack.c.l.b16 %v780
    %v1251 = vunpack.c.h.b16 %v780
    %v1252 = vunpack.c.l.b16 %v781
    %v1253 = vunpack.c.h.b16 %v781
    %v1254 = vunpack.c.l.b16 %v782
    %v1255 = vunpack.c.h.b16 %v782
    %v1256 = vunpack.c.l.b16 %v783
    %v1257 = vunpack.c.h.b16 %v783
    %v1258 = vunpack.c.l.b16 %v784
    %v1259 = vunpack.c.h.b16 %v784
    %v1260 = vunpack.c.l.b16 %v785
    %v1261 = vunpack.c.h.b16 %v785
    %v1262 = vunpack.c.l.b16 %v786
    %v1263 = vunpack.c.h.b16 %v786
    %v1264 = vunpack.c.l.b16 %v787
    %v1265 = vunpack.c.h.b16 %v787
    %v1266 = vunpack.c.l.b16 %v788
    %v1267 = vunpack.c.h.b16 %v788
    %v1268 = vunpack.c.l.b16 %v789
    %v1269 = vunpack.c.h.b16 %v789
    %v1270 = vunpack.c.l.b16 %v790
    %v1271 = vunpack.c.h.b16 %v790
    %v1272 = vunpack.c.l.b16 %v791
    %v1273 = vunpack.c.h.b16 %v791
    %v1274 = vunpack.c.l.b16 %v792
    %v1275 = vunpack.c.h.b16 %v792
    %v1276 = vunpack.c.l.b16 %v793
    %v1277 = vunpack.c.h.b16 %v793
    %v1278 = vunpack.c.l.b16 %v794
    %v1279 = vunpack.c.h.b16 %v794
    %v1280 = vunpack.c.l.b16 %v795
    %v1281 = vunpack.c.h.b16 %v795
    %v1282 = vunpack.c.l.b16 %v796
    %v1283 = vunpack.c.h.b16 %v796
    %v1284 = vunpack.c.l.b16 %v797
    %v1285 = vunpack.c.h.b16 %v797
    %v1286 = vunpack.c.l.b16 %v798
    %v1287 = vunpack.c.h.b16 %v798
    %v1288 = vunpack.c.l.b16 %v799
    %v1289 = vunpack.c.h.b16 %v799
    %v1290 = vunpack.c.l.b16 %v800
    %v1291 = vunpack.c.h.b16 %v800
    %v1292 = vunpack.c.l.b16 %v801
    %v1293 = vunpack.c.h.b16 %v801
    %v1294 = vunpack.c.l.b16 %v802
    %v1295 = vunpack.c.h.b16 %v802
    %v1296 = vunpack.c.l.b16 %v803
    %v1297 = vunpack.c.h.b16 %v803
    %v1298 = vunpack.c.l.b16 %v804
    %v1299 = vunpack.c.h.b16 %v804
    %v1300 = vunpack.c.l.b16 %v805
    %v1301 = vunpack.c.h.b16 %v805
    %v1302 = vunpack.c.l.b16 %v806
    %v1303 = vunpack.c.h.b16 %v806
    %v1304 = vunpack.c.l.b16 %v807
    %v1305 = vunpack.c.h.b16 %v807
    %v1306 = vunpack.c.l.b16 %v808
    %v1307 = vunpack.c.h.b16 %v808
    %v1308 = vunpack.c.l.b16 %v809
    %v1309 = vunpack.c.h.b16 %v809
    %v1310 = vunpack.c.l.b16 %v810
    %v1311 = vunpack.c.h.b16 %v810
    %v1312 = vunpack.c.l.b16 %v811
    %v1313 = vunpack.c.h.b16 %v811
    %v1314 = vunpack.c.l.b16 %v812
    %v1315 = vunpack.c.h.b16 %v812
    %v1316 = vunpack.c.l.b16 %v813
    %v1317 = vunpack.c.h.b16 %v813
    %v1318 = vunpack.c.l.b16 %v814
    %v1319 = vunpack.c.h.b16 %v814
    %v1320 = vunpack.c.l.b16 %v815
    %v1321 = vunpack.c.h.b16 %v815
    %v1322 = vunpack.c.l.b16 %v816
    %v1323 = vunpack.c.h.b16 %v816
    %v1324 = vunpack.c.l.b16 %v817
    %v1325 = vunpack.c.h.b16 %v817
    %v1326 = vunpack.c.l.b16 %v818
    %v1327 = vunpack.c.h.b16 %v818
    %v1328 = vunpack.c.l.b16 %v819
    %v1329 = vunpack.c.h.b16 %v819
    %v1330 = vunpack.c.l.b16 %v820
    %v1331 = vunpack.c.h.b16 %v820
    %v1332 = vunpack.c.l.b16 %v821
    %v1333 = vunpack.c.h.b16 %v821
    %v1334 = vunpack.c.l.b16 %v822
    %v1335 = vunpack.c.h.b16 %v822
    %v1336 = vunpack.c.l.b16 %v823
    %v1337 = vunpack.c.h.b16 %v823
    %v1338 = vunpack.c.l.b16 %v824
    %v1339 = vunpack.c.h.b16 %v824
    %v1340 = vunpack.c.l.b16 %v825
    %v1341 = vunpack.c.h.b16 %v825
    %v1342 = vunpack.c.l.b16 %v826
    %v1343 = vunpack.c.h.b16 %v826
    %v1344 = vunpack.c.l.b16 %v827
    %v1345 = vunpack.c.h.b16 %v827
    %v1346 = vunpack.c.l.b16 %v828
    %v1347 = vunpack.c.h.b16 %v828
    %v1348 = vunpack.c.l.b16 %v829
    %v1349 = vunpack.c.h.b16 %v829
    %v1350 = vunpack.c.l.b16 %v830
    %v1351 = vunpack.c.h.b16 %v830
    %v1352 = vunpack.c.l.b16 %v831
    %v1353 = vunpack.c.h.b16 %v831
    %v1354 = vunpack.c.l.b16 %v832
    %v1355 = vunpack.c.h.b16 %v832
    %v1356 = vunpack.c.l.b16 %v833
    %v1357 = vunpack.c.h.b16 %v833
    %v1358 = vunpack.c.l.b16 %v834
    %v1359 = vunpack.c.h.b16 %v834
    %v1360 = vunpack.c.l.b16 %v835
    %v1361 = vunpack.c.h.b16 %v835
    %v1362 = vunpack.c.l.b16 %v836
    %v1363 = vunpack.c.h.b16 %v836
    %v1364 = vunpack.c.l.b16 %v837
    %v1365 = vunpack.c.h.b16 %v837
    %v1366 = vunpack.c.l.b16 %v838
    %v1367 = vunpack.c.h.b16 %v838
    %v1368 = vunpack.c.l.b16 %v839
    %v1369 = vunpack.c.h.b16 %v839
    %v1370 = vunpack.c.l.b16 %v840
    %v1371 = vunpack.c.h.b16 %v840
    %v1372 = vunpack.c.l.b16 %v841
    %v1373 = vunpack.c.h.b16 %v841
    %v1374 = vunpack.c.l.b16 %v842
    %v1375 = vunpack.c.h.b16 %v842
    %v1376 = vunpack.c.l.b16 %v843
    %v1377 = vunpack.c.h.b16 %v843
    %v1378 = vunpack.c.l.b16 %v844
    %v1379 = vunpack.c.h.b16 %v844
    %v1380 = vunpack.c.l.b16 %v845
    %v1381 = vunpack.c.h.b16 %v845
    %v1382 = vunpack.c.l.b16 %v846
    %v1383 = vunpack.c.h.b16 %v846
    %v1384 = vunpack.c.l.b16 %v847
    %v1385 = vunpack.c.h.b16 %v847
    %v1386 = vunpack.c.l.b16 %v848
    %v1387 = vunpack.c.h.b16 %v848
    %v1388 = vunpack.c.l.b16 %v849
    %v1389 = vunpack.c.h.b16 %v849
    %v1390 = vunpack.c.l.b16 %v850
    %v1391 = vunpack.c.h.b16 %v850
    %v1392 = vpack.c.b16 %v1074, %v1072
    %v1393 = vpack.c.b16 %v1075, %v1073
    %v1394 = vpack.c.b16 %v1078, %v1076
    %v1395 = vpack.c.b16 %v1079, %v1077
    %v1396 = vpack.c.b16 %v1082, %v1080
    %v1397 = vpack.c.b16 %v1083, %v1081
    %v1398 = vpack.c.b16 %v1086, %v1084
    %v1399 = vpack.c.b16 %v1087, %v1085
    %v1400 = vpack.c.b16 %v1090, %v1088
    %v1401 = vpack.c.b16 %v1091, %v1089
    %v1402 = vpack.c.b16 %v1094, %v1092
    %v1403 = vpack.c.b16 %v1095, %v1093
    %v1404 = vpack.c.b16 %v1098, %v1096
    %v1405 = vpack.c.b16 %v1099, %v1097
    %v1406 = vpack.c.b16 %v1102, %v1100
    %v1407 = vpack.c.b16 %v1103, %v1101
    %v1408 = vpack.c.b16 %v1106, %v1104
    %v1409 = vpack.c.b16 %v1107, %v1105
    %v1410 = vpack.c.b16 %v1110, %v1108
    %v1411 = vpack.c.b16 %v1111, %v1109
    %v1412 = vpack.c.b16 %v1114, %v1112
    %v1413 = vpack.c.b16 %v1115, %v1113
    %v1414 = vpack.c.b16 %v1118, %v1116
    %v1415 = vpack.c.b16 %v1119, %v1117
    %v1416 = vpack.c.b16 %v1122, %v1120
    %v1417 = vpack.c.b16 %v1123, %v1121
    %v1418 = vpack.c.b16 %v1126, %v1124
    %v1419 = vpack.c.b16 %v1127, %v1125
    %v1420 = vpack.c.b16 %v1130, %v1128
    %v1421 = vpack.c.b16 %v1131, %v1129
    %v1422 = vpack.c.b16 %v1134, %v1132
    %v1423 = vpack.c.b16 %v1135, %v1133
    %v1424 = vpack.c.b16 %v1138, %v1136
    %v1425 = vpack.c.b16 %v1139, %v1137
    %v1426 = vpack.c.b16 %v1142, %v1140
    %v1427 = vpack.c.b16 %v1143, %v1141
    %v1428 = vpack.c.b16 %v1146, %v1144
    %v1429 = vpack.c.b16 %v1147, %v1145
    %v1430 = vpack.c.b16 %v1150, %v1148
    %v1431 = vpack.c.b16 %v1151, %v1149
    %v1432 = vpack.c.b16 %v1154, %v1152
    %v1433 = vpack.c.b16 %v1155, %v1153
    %v1434 = vpack.c.b16 %v1158, %v1156
    %v1435 = vpack.c.b16 %v1159, %v1157
    %v1436 = vpack.c.b16 %v1162, %v1160
    %v1437 = vpack.c.b16 %v1163, %v1161
    %v1438 = vpack.c.b16 %v1166, %v1164
    %v1439 = vpack.c.b16 %v1167, %v1165
    %v1440 = vpack.c.b16 %v1170, %v1168
    %v1441 = vpack.c.b16 %v1171, %v1169
    %v1442 = vpack.c.b16 %v1174, %v1172
    %v1443 = vpack.c.b16 %v1175, %v1173
    %v1444 = vpack.c.b16 %v1178, %v1176
    %v1445 = vpack.c.b16 %v1179, %v1177
    %v1446 = vpack.c.b16 %v1182, %v1180
    %v1447 = vpack.c.b16 %v1183, %v1181
    %v1448 = vpack.c.b16 %v1186, %v1184
    %v1449 = vpack.c.b16 %v1187, %v1185
    %v1450 = vpack.c.b16 %v1190, %v1188
    %v1451 = vpack.c.b16 %v1191, %v1189
    %v1452 = vpack.c.b16 %v1194, %v1192
    %v1453 = vpack.c.b16 %v1195, %v1193
    %v1454 = vpack.c.b16 %v1198, %v1196
    %v1455 = vpack.c.b16 %v1199, %v1197
    %v1456 = vpack.c.b16 %v1202, %v1200
    %v1457 = vpack.c.b16 %v1203, %v1201
    %v1458 = vpack.c.b16 %v1206, %v1204
    %v1459 = vpack.c.b16 %v1207, %v1205
    %v1460 = vpack.c.b16 %v1210, %v1208
    %v1461 = vpack.c.b16 %v1211, %v1209
    %v1462 = vpack.c.b16 %v1214, %v1212
    %v1463 = vpack.c.b16 %v1215, %v1213
    %v1464 = vpack.c.b16 %v1218, %v1216
    %v1465 = vpack.c.b16 %v1219, %v1217
    %v1466 = vpack.c.b16 %v1222, %v1220
    %v1467 = vpack.c.b16 %v1223, %v1221
    %v1468 = vpack.c.b16 %v1226, %v1224
    %v1469 = vpack.c.b16 %v1227, %v1225
    %v1470 = vpack.c.b16 %v1230, %v1228
    %v1471 = vpack.c.b16 %v1231, %v1229
    %v1472 = vpack.c.b16 %v1234, %v1232
    %v1473 = vpack.c.b16 %v1235, %v1233
    %v1474 = vpack.c.b16 %v1238, %v1236
    %v1475 = vpack.c.b16 %v1239, %v1237
    %v1476 = vpack.c.b16 %v1242, %v1240
    %v1477 = vpack.c.b16 %v1243, %v1241
    %v1478 = vpack.c.b16 %v1246, %v1244
    %v1479 = vpack.c.b16 %v1247, %v1245
    %v1480 = vpack.c.b16 %v1250, %v1248
    %v1481 = vpack.c.b16 %v1251, %v1249
    %v1482 = vpack.c.b16 %v1254, %v1252
    %v1483 = vpack.c.b16 %v1255, %v1253
    %v1484 = vpack.c.b16 %v1258, %v1256
    %v1485 = vpack.c.b16 %v1259, %v1257
    %v1486 = vpack.c.b16 %v1262, %v1260
    %v1487 = vpack.c.b16 %v1263, %v1261
    %v1488 = vpack.c.b16 %v1266, %v1264
    %v1489 = vpack.c.b16 %v1267, %v1265
    %v1490 = vpack.c.b16 %v1270, %v1268
    %v1491 = vpack.c.b16 %v1271, %v1269
    %v1492 = vpack.c.b16 %v1274, %v1272
    %v1493 = vpack.c.b16 %v1275, %v1273
    %v1494 = vpack.c.b16 %v1278, %v1276
    %v1495 = vpack.c.b16 %v1279, %v1277
    %v1496 = vpack.c.b16 %v1282, %v1280
    %v1497 = vpack.c.b16 %v1283, %v1281
    %v1498 = vpack.c.b16 %v1286, %v1284
    %v1499 = vpack.c.b16 %v1287, %v1285
    %v1500 = vpack.c.b16 %v1290, %v1288
    %v1501 = vpack.c.b16 %v1291, %v1289
    %v1502 = vpack.c.b16 %v1294, %v1292
    %v1503 = vpack.c.b16 %v1295, %v1293
    %v1504 = vpack.c.b16 %v1298, %v1296
    %v1505 = vpack.c.b16 %v1299, %v1297
    %v1506 = vpack.c.b16 %v1302, %v1300
    %v1507 = vpack.c.b16 %v1303, %v1301
    %v1508 = vpack.c.b16 %v1306, %v1304
    %v1509 = vpack.c.b16 %v1307, %v1305
    %v1510 = vpack.c.b16 %v1310, %v1308
    %v1511 = vpack.c.b16 %v1311, %v1309
    %v1512 = vpack.c.b16 %v1314, %v1312
    %v1513 = vpack.c.b16 %v1315, %v1313
    %v1514 = vpack.c.b16 %v1318, %v1316
    %v1515 = vpack.c.b16 %v1319, %v1317
    %v1516 = vpack.c.b16 %v1322, %v1320
    %v1517 = vpack.c.b16 %v1323, %v1321
    %v1518 = vpack.c.b16 %v1326, %v1324
    %v1519 = vpack.c.b16 %v1327, %v1325
    %v1520 = vpack.c.b16 %v1330, %v1328
    %v1521 = vpack.c.b16 %v1331, %v1329
    %v1522 = vpack.c.b16 %v1334, %v1332
    %v1523 = vpack.c.b16 %v1335, %v1333
    %v1524 = vpack.c.b16 %v1338, %v1336
    %v1525 = vpack.c.b16 %v1339, %v1337
    %v1526 = vpack.c.b16 %v1342, %v1340
    %v1527 = vpack.c.b16 %v1343, %v1341
    %v1528 = vpack.c.b16 %v1346, %v1344
    %v1529 = vpack.c.b16 %v1347, %v1345
    %v1530 = vpack.c.b16 %v1350, %v1348
    %v1531 = vpack.c.b16 %v1351, %v1349
    %v1532 = vpack.c.b16 %v1354, %v1352
    %v1533 = vpack.c.b16 %v1355, %v1353
    %v1534 = vpack.c.b16 %v1358, %v1356
    %v1535 = vpack.c.b16 %v1359, %v1357
    %v1536 = vpack.c.b16 %v1362, %v1360
    %v1537 = vpack.c.b16 %v1363, %v1361
    %v1538 = vpack.c.b16 %v1366, %v1364
    %v1539 = vpack.c.b16 %v1367, %v1365
    %v1540 = vpack.c.b16 %v1370, %v1368
    %v1541 = vpack.c.b16 %v1371, %v1369
    %v1542 = vpack.c.b16 %v1374, %v1372
    %v1543 = vpack.c.b16 %v1375, %v1373
    %v1544 = vpack.c.b16 %v1378, %v1376
    %v1545 = vpack.c.b16 %v1379, %v1377
    %v1546 = vpack.c.b16 %v1382, %v1380
    %v1547 = vpack.c.b16 %v1383, %v1381
    %v1548 = vpack.c.b16 %v1386, %v1384
    %v1549 = vpack.c.b16 %v1387, %v1385
    %v1550 = vpack.c.b16 %v1390, %v1388
    %v1551 = vpack.c.b16 %v1391, %v1389
    %1712 = vmatpush.bf16.msra.mxu0 %v1406
    %1713 = vmatpush.bf16.msra.mxu0 %v1404
    %1714 = vmatpush.bf16.msra.mxu0 %v1402
    %1715 = vmatpush.bf16.msra.mxu0 %v1400
    %1716 = vmatpush.bf16.msra.mxu0 %v1398
    %1717 = vmatpush.bf16.msra.mxu0 %v1396
    %1718 = vmatpush.bf16.msra.mxu0 %v1394
    %1719 = vmatpush.bf16.msra.mxu0 %v1392
    %1720 = vmatmul.bf16.gmra.mxu0 %v902
    %v1721 = vpop.f32.mrf.mxu0
    %v1722 = vadd.f32 0.0, %v1721
    %v1723 = vpop.f32.mrf.mxu0
    %1724 = vdwg.mxu0
    %1725 = vmatpush.bf16.msra.mxu0 %v1422
    %1726 = vmatpush.bf16.msra.mxu0 %v1420
    %1727 = vmatpush.bf16.msra.mxu0 %v1418
    %1728 = vmatpush.bf16.msra.mxu0 %v1416
    %1729 = vmatpush.bf16.msra.mxu0 %v1414
    %1730 = vmatpush.bf16.msra.mxu0 %v1412
    %1731 = vmatpush.bf16.msra.mxu0 %v1410
    %1732 = vmatpush.bf16.msra.mxu0 %v1408
    %1733 = vmatmul.bf16.gmra.mxu0 %v903
    %v1734 = vpop.f32.mrf.mxu0
    %v1735 = vadd.f32 %v1722, %v1734
    %v1736 = vpop.f32.mrf.mxu0
    %1737 = vdwg.mxu0
    %1738 = vmatpush.bf16.msra.mxu0 %v1438
    %1739 = vmatpush.bf16.msra.mxu0 %v1436
    %1740 = vmatpush.bf16.msra.mxu0 %v1434
    %1741 = vmatpush.bf16.msra.mxu0 %v1432
    %1742 = vmatpush.bf16.msra.mxu0 %v1430
    %1743 = vmatpush.bf16.msra.mxu0 %v1428
    %1744 = vmatpush.bf16.msra.mxu0 %v1426
    %1745 = vmatpush.bf16.msra.mxu0 %v1424
    %1746 = vmatmul.bf16.gmra.mxu0 %v904
    %v1747 = vpop.f32.mrf.mxu0
    %v1748 = vadd.f32 %v1735, %v1747
    %v1749 = vpop.f32.mrf.mxu0
    %1750 = vdwg.mxu0
    %1751 = vmatpush.bf16.msra.mxu0 %v1454
    %1752 = vmatpush.bf16.msra.mxu0 %v1452
    %1753 = vmatpush.bf16.msra.mxu0 %v1450
    %1754 = vmatpush.bf16.msra.mxu0 %v1448
    %1755 = vmatpush.bf16.msra.mxu0 %v1446
    %1756 = vmatpush.bf16.msra.mxu0 %v1444
    %1757 = vmatpush.bf16.msra.mxu0 %v1442
    %1758 = vmatpush.bf16.msra.mxu0 %v1440
    %1759 = vmatmul.bf16.gmra.mxu0 %v905
    %v1760 = vpop.f32.mrf.mxu0
    %v1761 = vadd.f32 %v1748, %v1760
    %v1762 = vpop.f32.mrf.mxu0
    %1763 = vdwg.mxu0
    %1764 = vmatpush.bf16.msra.mxu0 %v1470
    %1765 = vmatpush.bf16.msra.mxu0 %v1468
    %1766 = vmatpush.bf16.msra.mxu0 %v1466
    %1767 = vmatpush.bf16.msra.mxu0 %v1464
    %1768 = vmatpush.bf16.msra.mxu0 %v1462
    %1769 = vmatpush.bf16.msra.mxu0 %v1460
    %1770 = vmatpush.bf16.msra.mxu0 %v1458
    %1771 = vmatpush.bf16.msra.mxu0 %v1456
    %1772 = vmatmul.bf16.gmra.mxu0 %v906
    %v1773 = vpop.f32.mrf.mxu0
    %v1774 = vadd.f32 %v1761, %v1773
    %v1775 = vpop.f32.mrf.mxu0
    %1776 = vdwg.mxu0
    %1777 = vmatpush.bf16.msra.mxu0 %v1486
    %1778 = vmatpush.bf16.msra.mxu0 %v1484
    %1779 = vmatpush.bf16.msra.mxu0 %v1482
    %1780 = vmatpush.bf16.msra.mxu0 %v1480
    %1781 = vmatpush.bf16.msra.mxu0 %v1478
    %1782 = vmatpush.bf16.msra.mxu0 %v1476
    %1783 = vmatpush.bf16.msra.mxu0 %v1474
    %1784 = vmatpush.bf16.msra.mxu0 %v1472
    %1785 = vmatmul.bf16.gmra.mxu0 %v907
    %v1786 = vpop.f32.mrf.mxu0
    %v1787 = vadd.f32 %v1774, %v1786
    %v1788 = vpop.f32.mrf.mxu0
    %1789 = vdwg.mxu0
    %1790 = vmatpush.bf16.msra.mxu0 %v1502
    %1791 = vmatpush.bf16.msra.mxu0 %v1500
    %1792 = vmatpush.bf16.msra.mxu0 %v1498
    %1793 = vmatpush.bf16.msra.mxu0 %v1496
    %1794 = vmatpush.bf16.msra.mxu0 %v1494
    %1795 = vmatpush.bf16.msra.mxu0 %v1492
    %1796 = vmatpush.bf16.msra.mxu0 %v1490
    %1797 = vmatpush.bf16.msra.mxu0 %v1488
    %1798 = vmatmul.bf16.gmra.mxu0 %v908
    %v1799 = vpop.f32.mrf.mxu0
    %v1800 = vadd.f32 %v1787, %v1799
    %v1801 = vpop.f32.mrf.mxu0
    %1802 = vdwg.mxu0
    %1803 = vmatpush.bf16.msra.mxu0 %v1518
    %1804 = vmatpush.bf16.msra.mxu0 %v1516
    %1805 = vmatpush.bf16.msra.mxu0 %v1514
    %1806 = vmatpush.bf16.msra.mxu0 %v1512
    %1807 = vmatpush.bf16.msra.mxu0 %v1510
    %1808 = vmatpush.bf16.msra.mxu0 %v1508
    %1809 = vmatpush.bf16.msra.mxu0 %v1506
    %1810 = vmatpush.bf16.msra.mxu0 %v1504
    %1811 = vmatmul.bf16.gmra.mxu0 %v909
    %v1812 = vpop.f32.mrf.mxu0
    %v1813 = vadd.f32 %v1800, %v1812
    %v1814 = vpop.f32.mrf.mxu0
    %1815 = vdwg.mxu0
    %1816 = vmatpush.bf16.msra.mxu0 %v1534
    %1817 = vmatpush.bf16.msra.mxu0 %v1532
    %1818 = vmatpush.bf16.msra.mxu0 %v1530
    %1819 = vmatpush.bf16.msra.mxu0 %v1528
    %1820 = vmatpush.bf16.msra.mxu0 %v1526
    %1821 = vmatpush.bf16.msra.mxu0 %v1524
    %1822 = vmatpush.bf16.msra.mxu0 %v1522
    %1823 = vmatpush.bf16.msra.mxu0 %v1520
    %1824 = vmatmul.bf16.gmra.mxu0 %v910
    %v1825 = vpop.f32.mrf.mxu0
    %v1826 = vadd.f32 %v1813, %v1825
    %v1827 = vpop.f32.mrf.mxu0
    %1828 = vdwg.mxu0
    %1829 = vmatpush.bf16.msra.mxu0 %v1550
    %1830 = vmatpush.bf16.msra.mxu0 %v1548
    %1831 = vmatpush.bf16.msra.mxu0 %v1546
    %1832 = vmatpush.bf16.msra.mxu0 %v1544
    %1833 = vmatpush.bf16.msra.mxu0 %v1542
    %1834 = vmatpush.bf16.msra.mxu0 %v1540
    %1835 = vmatpush.bf16.msra.mxu0 %v1538
    %1836 = vmatpush.bf16.msra.mxu0 %v1536
    %1837 = vmatmul.bf16.gmra.mxu0 %v911
    %v1838 = vpop.f32.mrf.mxu0
    %v1839 = vadd.f32 %v1826, %v1838
    %v1840 = vpop.f32.mrf.mxu0
    %1841 = vdwg.mxu0
    %1842 = vmatpush.bf16.msra.mxu0 %v1407
    %1843 = vmatpush.bf16.msra.mxu0 %v1405
    %1844 = vmatpush.bf16.msra.mxu0 %v1403
    %1845 = vmatpush.bf16.msra.mxu0 %v1401
    %1846 = vmatpush.bf16.msra.mxu0 %v1399
    %1847 = vmatpush.bf16.msra.mxu0 %v1397
    %1848 = vmatpush.bf16.msra.mxu0 %v1395
    %1849 = vmatpush.bf16.msra.mxu0 %v1393
    %1850 = vmatmul.bf16.gmra.mxu0 %v902
    %v1851 = vpop.f32.mrf.mxu0
    %v1852 = vadd.f32 0.0, %v1851
    %v1853 = vpop.f32.mrf.mxu0
    %1854 = vdwg.mxu0
    %1855 = vmatpush.bf16.msra.mxu0 %v1423
    %1856 = vmatpush.bf16.msra.mxu0 %v1421
    %1857 = vmatpush.bf16.msra.mxu0 %v1419
    %1858 = vmatpush.bf16.msra.mxu0 %v1417
    %1859 = vmatpush.bf16.msra.mxu0 %v1415
    %1860 = vmatpush.bf16.msra.mxu0 %v1413
    %1861 = vmatpush.bf16.msra.mxu0 %v1411
    %1862 = vmatpush.bf16.msra.mxu0 %v1409
    %1863 = vmatmul.bf16.gmra.mxu0 %v903
    %v1864 = vpop.f32.mrf.mxu0
    %v1865 = vadd.f32 %v1852, %v1864
    %v1866 = vpop.f32.mrf.mxu0
    %1867 = vdwg.mxu0
    %1868 = vmatpush.bf16.msra.mxu0 %v1439
    %1869 = vmatpush.bf16.msra.mxu0 %v1437
    %1870 = vmatpush.bf16.msra.mxu0 %v1435
    %1871 = vmatpush.bf16.msra.mxu0 %v1433
    %1872 = vmatpush.bf16.msra.mxu0 %v1431
    %1873 = vmatpush.bf16.msra.mxu0 %v1429
    %1874 = vmatpush.bf16.msra.mxu0 %v1427
    %1875 = vmatpush.bf16.msra.mxu0 %v1425
    %1876 = vmatmul.bf16.gmra.mxu0 %v904
    %v1877 = vpop.f32.mrf.mxu0
    %v1878 = vadd.f32 %v1865, %v1877
    %v1879 = vpop.f32.mrf.mxu0
    %1880 = vdwg.mxu0
    %1881 = vmatpush.bf16.msra.mxu0 %v1455
    %1882 = vmatpush.bf16.msra.mxu0 %v1453
    %1883 = vmatpush.bf16.msra.mxu0 %v1451
    %1884 = vmatpush.bf16.msra.mxu0 %v1449
    %1885 = vmatpush.bf16.msra.mxu0 %v1447
    %1886 = vmatpush.bf16.msra.mxu0 %v1445
    %1887 = vmatpush.bf16.msra.mxu0 %v1443
    %1888 = vmatpush.bf16.msra.mxu0 %v1441
    %1889 = vmatmul.bf16.gmra.mxu0 %v905
    %v1890 = vpop.f32.mrf.mxu0
    %v1891 = vadd.f32 %v1878, %v1890
    %v1892 = vpop.f32.mrf.mxu0
    %1893 = vdwg.mxu0
    %1894 = vmatpush.bf16.msra.mxu0 %v1471
    %1895 = vmatpush.bf16.msra.mxu0 %v1469
    %1896 = vmatpush.bf16.msra.mxu0 %v1467
    %1897 = vmatpush.bf16.msra.mxu0 %v1465
    %1898 = vmatpush.bf16.msra.mxu0 %v1463
    %1899 = vmatpush.bf16.msra.mxu0 %v1461
    %1900 = vmatpush.bf16.msra.mxu0 %v1459
    %1901 = vmatpush.bf16.msra.mxu0 %v1457
    %1902 = vmatmul.bf16.gmra.mxu0 %v906
    %v1903 = vpop.f32.mrf.mxu0
    %v1904 = vadd.f32 %v1891, %v1903
    %v1905 = vpop.f32.mrf.mxu0
    %1906 = vdwg.mxu0
    %1907 = vmatpush.bf16.msra.mxu0 %v1487
    %1908 = vmatpush.bf16.msra.mxu0 %v1485
    %1909 = vmatpush.bf16.msra.mxu0 %v1483
    %1910 = vmatpush.bf16.msra.mxu0 %v1481
    %1911 = vmatpush.bf16.msra.mxu0 %v1479
    %1912 = vmatpush.bf16.msra.mxu0 %v1477
    %1913 = vmatpush.bf16.msra.mxu0 %v1475
    %1914 = vmatpush.bf16.msra.mxu0 %v1473
    %1915 = vmatmul.bf16.gmra.mxu0 %v907
    %v1916 = vpop.f32.mrf.mxu0
    %v1917 = vadd.f32 %v1904, %v1916
    %v1918 = vpop.f32.mrf.mxu0
    %1919 = vdwg.mxu0
    %1920 = vmatpush.bf16.msra.mxu0 %v1503
    %1921 = vmatpush.bf16.msra.mxu0 %v1501
    %1922 = vmatpush.bf16.msra.mxu0 %v1499
    %1923 = vmatpush.bf16.msra.mxu0 %v1497
    %1924 = vmatpush.bf16.msra.mxu0 %v1495
    %1925 = vmatpush.bf16.msra.mxu0 %v1493
    %1926 = vmatpush.bf16.msra.mxu0 %v1491
    %1927 = vmatpush.bf16.msra.mxu0 %v1489
    %1928 = vmatmul.bf16.gmra.mxu0 %v908
    %v1929 = vpop.f32.mrf.mxu0
    %v1930 = vadd.f32 %v1917, %v1929
    %v1931 = vpop.f32.mrf.mxu0
    %1932 = vdwg.mxu0
    %1933 = vmatpush.bf16.msra.mxu0 %v1519
    %1934 = vmatpush.bf16.msra.mxu0 %v1517
    %1935 = vmatpush.bf16.msra.mxu0 %v1515
    %1936 = vmatpush.bf16.msra.mxu0 %v1513
    %1937 = vmatpush.bf16.msra.mxu0 %v1511
    %1938 = vmatpush.bf16.msra.mxu0 %v1509
    %1939 = vmatpush.bf16.msra.mxu0 %v1507
    %1940 = vmatpush.bf16.msra.mxu0 %v1505
    %1941 = vmatmul.bf16.gmra.mxu0 %v909
    %v1942 = vpop.f32.mrf.mxu0
    %v1943 = vadd.f32 %v1930, %v1942
    %v1944 = vpop.f32.mrf.mxu0
    %1945 = vdwg.mxu0
    %1946 = vmatpush.bf16.msra.mxu0 %v1535
    %1947 = vmatpush.bf16.msra.mxu0 %v1533
    %1948 = vmatpush.bf16.msra.mxu0 %v1531
    %1949 = vmatpush.bf16.msra.mxu0 %v1529
    %1950 = vmatpush.bf16.msra.mxu0 %v1527
    %1951 = vmatpush.bf16.msra.mxu0 %v1525
    %1952 = vmatpush.bf16.msra.mxu0 %v1523
    %1953 = vmatpush.bf16.msra.mxu0 %v1521
    %1954 = vmatmul.bf16.gmra.mxu0 %v910
    %v1955 = vpop.f32.mrf.mxu0
    %v1956 = vadd.f32 %v1943, %v1955
    %v1957 = vpop.f32.mrf.mxu0
    %1958 = vdwg.mxu0
    %1959 = vmatpush.bf16.msra.mxu0 %v1551
    %1960 = vmatpush.bf16.msra.mxu0 %v1549
    %1961 = vmatpush.bf16.msra.mxu0 %v1547
    %1962 = vmatpush.bf16.msra.mxu0 %v1545
    %1963 = vmatpush.bf16.msra.mxu0 %v1543
    %1964 = vmatpush.bf16.msra.mxu0 %v1541
    %1965 = vmatpush.bf16.msra.mxu0 %v1539
    %1966 = vmatpush.bf16.msra.mxu0 %v1537
    %1967 = vmatmul.bf16.gmra.mxu0 %v911
    %v1968 = vpop.f32.mrf.mxu0
    %v1969 = vadd.f32 %v1956, %v1968
    %v1970 = vpop.f32.mrf.mxu0
    %1971 = vdwg.mxu0
    %v1972 = vrot.slane %v681, 2
    %v1973 = vrot.slane %v682, 2
    %v1976 = vrot.slane %v689, 6
    %v1977 = vrot.slane %v690, 6
    %v1980 = vsel %vm857, %v1972, %v1976
    %v1981 = vsel %vm857, %v1973, %v1977
    %v1982 = vpack.c.bf16 %v1980, %v1980
    %v1983 = vpack.c.bf16 %v1981, %v1981
    %1984 = vmatpush.bf16.msra.mxu0 %v1406
    %1985 = vmatpush.bf16.msra.mxu0 %v1404
    %1986 = vmatpush.bf16.msra.mxu0 %v1402
    %1987 = vmatpush.bf16.msra.mxu0 %v1400
    %1988 = vmatpush.bf16.msra.mxu0 %v1398
    %1989 = vmatpush.bf16.msra.mxu0 %v1396
    %1990 = vmatpush.bf16.msra.mxu0 %v1394
    %1991 = vmatpush.bf16.msra.mxu0 %v1392
    %1992 = vmatmul.bf16.gmra.mxu0 %v904
    %v1993 = vpop.f32.mrf.mxu0
    %v1994 = vadd.f32 0.0, %v1993
    %v1995 = vpop.f32.mrf.mxu0
    %1996 = vdwg.mxu0
    %1997 = vmatpush.bf16.msra.mxu0 %v1422
    %1998 = vmatpush.bf16.msra.mxu0 %v1420
    %1999 = vmatpush.bf16.msra.mxu0 %v1418
    %2000 = vmatpush.bf16.msra.mxu0 %v1416
    %2001 = vmatpush.bf16.msra.mxu0 %v1414
    %2002 = vmatpush.bf16.msra.mxu0 %v1412
    %2003 = vmatpush.bf16.msra.mxu0 %v1410
    %2004 = vmatpush.bf16.msra.mxu0 %v1408
    %2005 = vmatmul.bf16.gmra.mxu0 %v905
    %v2006 = vpop.f32.mrf.mxu0
    %v2007 = vadd.f32 %v1994, %v2006
    %v2008 = vpop.f32.mrf.mxu0
    %2009 = vdwg.mxu0
    %2010 = vmatpush.bf16.msra.mxu0 %v1438
    %2011 = vmatpush.bf16.msra.mxu0 %v1436
    %2012 = vmatpush.bf16.msra.mxu0 %v1434
    %2013 = vmatpush.bf16.msra.mxu0 %v1432
    %2014 = vmatpush.bf16.msra.mxu0 %v1430
    %2015 = vmatpush.bf16.msra.mxu0 %v1428
    %2016 = vmatpush.bf16.msra.mxu0 %v1426
    %2017 = vmatpush.bf16.msra.mxu0 %v1424
    %2018 = vmatmul.bf16.gmra.mxu0 %v906
    %v2019 = vpop.f32.mrf.mxu0
    %v2020 = vadd.f32 %v2007, %v2019
    %v2021 = vpop.f32.mrf.mxu0
    %2022 = vdwg.mxu0
    %2023 = vmatpush.bf16.msra.mxu0 %v1454
    %2024 = vmatpush.bf16.msra.mxu0 %v1452
    %2025 = vmatpush.bf16.msra.mxu0 %v1450
    %2026 = vmatpush.bf16.msra.mxu0 %v1448
    %2027 = vmatpush.bf16.msra.mxu0 %v1446
    %2028 = vmatpush.bf16.msra.mxu0 %v1444
    %2029 = vmatpush.bf16.msra.mxu0 %v1442
    %2030 = vmatpush.bf16.msra.mxu0 %v1440
    %2031 = vmatmul.bf16.gmra.mxu0 %v907
    %v2032 = vpop.f32.mrf.mxu0
    %v2033 = vadd.f32 %v2020, %v2032
    %v2034 = vpop.f32.mrf.mxu0
    %2035 = vdwg.mxu0
    %2036 = vmatpush.bf16.msra.mxu0 %v1470
    %2037 = vmatpush.bf16.msra.mxu0 %v1468
    %2038 = vmatpush.bf16.msra.mxu0 %v1466
    %2039 = vmatpush.bf16.msra.mxu0 %v1464
    %2040 = vmatpush.bf16.msra.mxu0 %v1462
    %2041 = vmatpush.bf16.msra.mxu0 %v1460
    %2042 = vmatpush.bf16.msra.mxu0 %v1458
    %2043 = vmatpush.bf16.msra.mxu0 %v1456
    %2044 = vmatmul.bf16.gmra.mxu0 %v908
    %v2045 = vpop.f32.mrf.mxu0
    %v2046 = vadd.f32 %v2033, %v2045
    %v2047 = vpop.f32.mrf.mxu0
    %2048 = vdwg.mxu0
    %2049 = vmatpush.bf16.msra.mxu0 %v1486
    %2050 = vmatpush.bf16.msra.mxu0 %v1484
    %2051 = vmatpush.bf16.msra.mxu0 %v1482
    %2052 = vmatpush.bf16.msra.mxu0 %v1480
    %2053 = vmatpush.bf16.msra.mxu0 %v1478
    %2054 = vmatpush.bf16.msra.mxu0 %v1476
    %2055 = vmatpush.bf16.msra.mxu0 %v1474
    %2056 = vmatpush.bf16.msra.mxu0 %v1472
    %2057 = vmatmul.bf16.gmra.mxu0 %v909
    %v2058 = vpop.f32.mrf.mxu0
    %v2059 = vadd.f32 %v2046, %v2058
    %v2060 = vpop.f32.mrf.mxu0
    %2061 = vdwg.mxu0
    %2062 = vmatpush.bf16.msra.mxu0 %v1502
    %2063 = vmatpush.bf16.msra.mxu0 %v1500
    %2064 = vmatpush.bf16.msra.mxu0 %v1498
    %2065 = vmatpush.bf16.msra.mxu0 %v1496
    %2066 = vmatpush.bf16.msra.mxu0 %v1494
    %2067 = vmatpush.bf16.msra.mxu0 %v1492
    %2068 = vmatpush.bf16.msra.mxu0 %v1490
    %2069 = vmatpush.bf16.msra.mxu0 %v1488
    %2070 = vmatmul.bf16.gmra.mxu0 %v910
    %v2071 = vpop.f32.mrf.mxu0
    %v2072 = vadd.f32 %v2059, %v2071
    %v2073 = vpop.f32.mrf.mxu0
    %2074 = vdwg.mxu0
    %2075 = vmatpush.bf16.msra.mxu0 %v1518
    %2076 = vmatpush.bf16.msra.mxu0 %v1516
    %2077 = vmatpush.bf16.msra.mxu0 %v1514
    %2078 = vmatpush.bf16.msra.mxu0 %v1512
    %2079 = vmatpush.bf16.msra.mxu0 %v1510
    %2080 = vmatpush.bf16.msra.mxu0 %v1508
    %2081 = vmatpush.bf16.msra.mxu0 %v1506
    %2082 = vmatpush.bf16.msra.mxu0 %v1504
    %2083 = vmatmul.bf16.gmra.mxu0 %v911
    %v2084 = vpop.f32.mrf.mxu0
    %v2085 = vadd.f32 %v2072, %v2084
    %v2086 = vpop.f32.mrf.mxu0
    %2087 = vdwg.mxu0
    %2088 = vmatpush.bf16.msra.mxu0 %v1534
    %2089 = vmatpush.bf16.msra.mxu0 %v1532
    %2090 = vmatpush.bf16.msra.mxu0 %v1530
    %2091 = vmatpush.bf16.msra.mxu0 %v1528
    %2092 = vmatpush.bf16.msra.mxu0 %v1526
    %2093 = vmatpush.bf16.msra.mxu0 %v1524
    %2094 = vmatpush.bf16.msra.mxu0 %v1522
    %2095 = vmatpush.bf16.msra.mxu0 %v1520
    %2096 = vmatmul.bf16.gmra.mxu0 %v1982
    %v2097 = vpop.f32.mrf.mxu0
    %v2098 = vadd.f32 %v2085, %v2097
    %v2099 = vpop.f32.mrf.mxu0
    %2100 = vdwg.mxu0
    %2101 = vmatpush.bf16.msra.mxu0 %v1550
    %2102 = vmatpush.bf16.msra.mxu0 %v1548
    %2103 = vmatpush.bf16.msra.mxu0 %v1546
    %2104 = vmatpush.bf16.msra.mxu0 %v1544
    %2105 = vmatpush.bf16.msra.mxu0 %v1542
    %2106 = vmatpush.bf16.msra.mxu0 %v1540
    %2107 = vmatpush.bf16.msra.mxu0 %v1538
    %2108 = vmatpush.bf16.msra.mxu0 %v1536
    %2109 = vmatmul.bf16.gmra.mxu0 %v1983
    %v2110 = vpop.f32.mrf.mxu0
    %v2111 = vadd.f32 %v2098, %v2110
    %v2112 = vpop.f32.mrf.mxu0
    %2113 = vdwg.mxu0
    %2114 = vmatpush.bf16.msra.mxu0 %v1407
    %2115 = vmatpush.bf16.msra.mxu0 %v1405
    %2116 = vmatpush.bf16.msra.mxu0 %v1403
    %2117 = vmatpush.bf16.msra.mxu0 %v1401
    %2118 = vmatpush.bf16.msra.mxu0 %v1399
    %2119 = vmatpush.bf16.msra.mxu0 %v1397
    %2120 = vmatpush.bf16.msra.mxu0 %v1395
    %2121 = vmatpush.bf16.msra.mxu0 %v1393
    %2122 = vmatmul.bf16.gmra.mxu0 %v904
    %v2123 = vpop.f32.mrf.mxu0
    %v2124 = vadd.f32 0.0, %v2123
    %v2125 = vpop.f32.mrf.mxu0
    %2126 = vdwg.mxu0
    %2127 = vmatpush.bf16.msra.mxu0 %v1423
    %2128 = vmatpush.bf16.msra.mxu0 %v1421
    %2129 = vmatpush.bf16.msra.mxu0 %v1419
    %2130 = vmatpush.bf16.msra.mxu0 %v1417
    %2131 = vmatpush.bf16.msra.mxu0 %v1415
    %2132 = vmatpush.bf16.msra.mxu0 %v1413
    %2133 = vmatpush.bf16.msra.mxu0 %v1411
    %2134 = vmatpush.bf16.msra.mxu0 %v1409
    %2135 = vmatmul.bf16.gmra.mxu0 %v905
    %v2136 = vpop.f32.mrf.mxu0
    %v2137 = vadd.f32 %v2124, %v2136
    %v2138 = vpop.f32.mrf.mxu0
    %2139 = vdwg.mxu0
    %2140 = vmatpush.bf16.msra.mxu0 %v1439
    %2141 = vmatpush.bf16.msra.mxu0 %v1437
    %2142 = vmatpush.bf16.msra.mxu0 %v1435
    %2143 = vmatpush.bf16.msra.mxu0 %v1433
    %2144 = vmatpush.bf16.msra.mxu0 %v1431
    %2145 = vmatpush.bf16.msra.mxu0 %v1429
    %2146 = vmatpush.bf16.msra.mxu0 %v1427
    %2147 = vmatpush.bf16.msra.mxu0 %v1425
    %2148 = vmatmul.bf16.gmra.mxu0 %v906
    %v2149 = vpop.f32.mrf.mxu0
    %v2150 = vadd.f32 %v2137, %v2149
    %v2151 = vpop.f32.mrf.mxu0
    %2152 = vdwg.mxu0
    %2153 = vmatpush.bf16.msra.mxu0 %v1455
    %2154 = vmatpush.bf16.msra.mxu0 %v1453
    %2155 = vmatpush.bf16.msra.mxu0 %v1451
    %2156 = vmatpush.bf16.msra.mxu0 %v1449
    %2157 = vmatpush.bf16.msra.mxu0 %v1447
    %2158 = vmatpush.bf16.msra.mxu0 %v1445
    %2159 = vmatpush.bf16.msra.mxu0 %v1443
    %2160 = vmatpush.bf16.msra.mxu0 %v1441
    %2161 = vmatmul.bf16.gmra.mxu0 %v907
    %v2162 = vpop.f32.mrf.mxu0
    %v2163 = vadd.f32 %v2150, %v2162
    %v2164 = vpop.f32.mrf.mxu0
    %2165 = vdwg.mxu0
    %2166 = vmatpush.bf16.msra.mxu0 %v1471
    %2167 = vmatpush.bf16.msra.mxu0 %v1469
    %2168 = vmatpush.bf16.msra.mxu0 %v1467
    %2169 = vmatpush.bf16.msra.mxu0 %v1465
    %2170 = vmatpush.bf16.msra.mxu0 %v1463
    %2171 = vmatpush.bf16.msra.mxu0 %v1461
    %2172 = vmatpush.bf16.msra.mxu0 %v1459
    %2173 = vmatpush.bf16.msra.mxu0 %v1457
    %2174 = vmatmul.bf16.gmra.mxu0 %v908
    %v2175 = vpop.f32.mrf.mxu0
    %v2176 = vadd.f32 %v2163, %v2175
    %v2177 = vpop.f32.mrf.mxu0
    %2178 = vdwg.mxu0
    %2179 = vmatpush.bf16.msra.mxu0 %v1487
    %2180 = vmatpush.bf16.msra.mxu0 %v1485
    %2181 = vmatpush.bf16.msra.mxu0 %v1483
    %2182 = vmatpush.bf16.msra.mxu0 %v1481
    %2183 = vmatpush.bf16.msra.mxu0 %v1479
    %2184 = vmatpush.bf16.msra.mxu0 %v1477
    %2185 = vmatpush.bf16.msra.mxu0 %v1475
    %2186 = vmatpush.bf16.msra.mxu0 %v1473
    %2187 = vmatmul.bf16.gmra.mxu0 %v909
    %v2188 = vpop.f32.mrf.mxu0
    %v2189 = vadd.f32 %v2176, %v2188
    %v2190 = vpop.f32.mrf.mxu0
    %2191 = vdwg.mxu0
    %2192 = vmatpush.bf16.msra.mxu0 %v1503
    %2193 = vmatpush.bf16.msra.mxu0 %v1501
    %2194 = vmatpush.bf16.msra.mxu0 %v1499
    %2195 = vmatpush.bf16.msra.mxu0 %v1497
    %2196 = vmatpush.bf16.msra.mxu0 %v1495
    %2197 = vmatpush.bf16.msra.mxu0 %v1493
    %2198 = vmatpush.bf16.msra.mxu0 %v1491
    %2199 = vmatpush.bf16.msra.mxu0 %v1489
    %2200 = vmatmul.bf16.gmra.mxu0 %v910
    %v2201 = vpop.f32.mrf.mxu0
    %v2202 = vadd.f32 %v2189, %v2201
    %v2203 = vpop.f32.mrf.mxu0
    %2204 = vdwg.mxu0
    %2205 = vmatpush.bf16.msra.mxu0 %v1519
    %2206 = vmatpush.bf16.msra.mxu0 %v1517
    %2207 = vmatpush.bf16.msra.mxu0 %v1515
    %2208 = vmatpush.bf16.msra.mxu0 %v1513
    %2209 = vmatpush.bf16.msra.mxu0 %v1511
    %2210 = vmatpush.bf16.msra.mxu0 %v1509
    %2211 = vmatpush.bf16.msra.mxu0 %v1507
    %2212 = vmatpush.bf16.msra.mxu0 %v1505
    %2213 = vmatmul.bf16.gmra.mxu0 %v911
    %v2214 = vpop.f32.mrf.mxu0
    %v2215 = vadd.f32 %v2202, %v2214
    %v2216 = vpop.f32.mrf.mxu0
    %2217 = vdwg.mxu0
    %2218 = vmatpush.bf16.msra.mxu0 %v1535
    %2219 = vmatpush.bf16.msra.mxu0 %v1533
    %2220 = vmatpush.bf16.msra.mxu0 %v1531
    %2221 = vmatpush.bf16.msra.mxu0 %v1529
    %2222 = vmatpush.bf16.msra.mxu0 %v1527
    %2223 = vmatpush.bf16.msra.mxu0 %v1525
    %2224 = vmatpush.bf16.msra.mxu0 %v1523
    %2225 = vmatpush.bf16.msra.mxu0 %v1521
    %2226 = vmatmul.bf16.gmra.mxu0 %v1982
    %v2227 = vpop.f32.mrf.mxu0
    %v2228 = vadd.f32 %v2215, %v2227
    %v2229 = vpop.f32.mrf.mxu0
    %2230 = vdwg.mxu0
    %2231 = vmatpush.bf16.msra.mxu0 %v1551
    %2232 = vmatpush.bf16.msra.mxu0 %v1549
    %2233 = vmatpush.bf16.msra.mxu0 %v1547
    %2234 = vmatpush.bf16.msra.mxu0 %v1545
    %2235 = vmatpush.bf16.msra.mxu0 %v1543
    %2236 = vmatpush.bf16.msra.mxu0 %v1541
    %2237 = vmatpush.bf16.msra.mxu0 %v1539
    %2238 = vmatpush.bf16.msra.mxu0 %v1537
    %2239 = vmatmul.bf16.gmra.mxu0 %v1983
    %v2240 = vpop.f32.mrf.mxu0
    %v2241 = vadd.f32 %v2228, %v2240
    %v2242 = vpop.f32.mrf.mxu0
    %2243 = vdwg.mxu0
    %v2244 = vld [vmem:[%s6] sm:$0x1]
    %v2245 = vld [vmem:[%s7] sm:$0x1]
    %v2246 = vrot.slane %v1839, 4
    %v2247 = vadd.f32 %v1839, %v2246
    %v2248 = vrot.slane %v2247, 2
    %v2249 = vadd.f32 %v2247, %v2248
    %v2250 = vrot.slane %v2249, 1
    %v2251 = vadd.f32 %v2249, %v2250
    %v2252 = vrot.slane %v1969, 4
    %v2253 = vadd.f32 %v1969, %v2252
    %v2254 = vrot.slane %v2253, 2
    %v2255 = vadd.f32 %v2253, %v2254
    %v2256 = vrot.slane %v2255, 1
    %v2257 = vadd.f32 %v2255, %v2256
    %v2258 = vadd.f32 %v2251, 0.0
    %v2259 = vadd.f32 %v2257, 0.0
    %v2260 = vmul.f32 %v1839, %v1839
    %v2261 = vmul.f32 %v1969, %v1969
    %v2262 = vrot.slane %v2260, 4
    %v2263 = vadd.f32 %v2260, %v2262
    %v2264 = vrot.slane %v2263, 2
    %v2265 = vadd.f32 %v2263, %v2264
    %v2266 = vrot.slane %v2265, 1
    %v2267 = vadd.f32 %v2265, %v2266
    %v2268 = vrot.slane %v2261, 4
    %v2269 = vadd.f32 %v2261, %v2268
    %v2270 = vrot.slane %v2269, 2
    %v2271 = vadd.f32 %v2269, %v2270
    %v2272 = vrot.slane %v2271, 1
    %v2273 = vadd.f32 %v2271, %v2272
    %v2274 = vadd.f32 %v2267, 0.0
    %v2275 = vadd.f32 %v2273, 0.0
    %v2276 = vrot.slane %v2111, 4
    %v2277 = vadd.f32 %v2111, %v2276
    %v2278 = vrot.slane %v2277, 2
    %v2279 = vadd.f32 %v2277, %v2278
    %v2280 = vrot.slane %v2279, 1
    %v2281 = vadd.f32 %v2279, %v2280
    %v2282 = vrot.slane %v2241, 4
    %v2283 = vadd.f32 %v2241, %v2282
    %v2284 = vrot.slane %v2283, 2
    %v2285 = vadd.f32 %v2283, %v2284
    %v2286 = vrot.slane %v2285, 1
    %v2287 = vadd.f32 %v2285, %v2286
    %v2288 = vadd.f32 %v2258, %v2281
    %v2289 = vadd.f32 %v2259, %v2287
    %v2290 = vmul.f32 %v2111, %v2111
    %v2291 = vmul.f32 %v2241, %v2241
    %v2292 = vrot.slane %v2290, 4
    %v2293 = vadd.f32 %v2290, %v2292
    %v2294 = vrot.slane %v2293, 2
    %v2295 = vadd.f32 %v2293, %v2294
    %v2296 = vrot.slane %v2295, 1
    %v2297 = vadd.f32 %v2295, %v2296
    %v2298 = vrot.slane %v2291, 4
    %v2299 = vadd.f32 %v2291, %v2298
    %v2300 = vrot.slane %v2299, 2
    %v2301 = vadd.f32 %v2299, %v2300
    %v2302 = vrot.slane %v2301, 1
    %v2303 = vadd.f32 %v2301, %v2302
    %v2304 = vadd.f32 %v2274, %v2297
    %v2305 = vadd.f32 %v2275, %v2303
    %v2306 = vadd.f32 %v2288, 0.0
    %v2307 = vadd.f32 %v2304, 0.0
    %2309 = vrot.lane.b32.xlu0 %v2288, 96
    %v2310 = vpop.permute.xlu0 %2309
    %v2312 = vadd.f32 %v2306, %v2310
    %2314 = vrot.lane.b32.xlu0 %v2304, 96
    %v2315 = vpop.permute.xlu0 %2314
    %v2317 = vadd.f32 %v2307, %v2315
    %2318 = vrot.lane.b32.xlu0 %v2288, 64
    %v2319 = vpop.permute.xlu0 %2318
    %v2321 = vadd.f32 %v2312, %v2319
    %2322 = vrot.lane.b32.xlu0 %v2304, 64
    %v2323 = vpop.permute.xlu0 %2322
    %v2325 = vadd.f32 %v2317, %v2323
    %2326 = vrot.lane.b32.xlu0 %v2288, 32
    %v2327 = vpop.permute.xlu0 %2326
    %v2329 = vadd.f32 %v2321, %v2327
    %2330 = vrot.lane.b32.xlu0 %v2304, 32
    %v2331 = vpop.permute.xlu0 %2330
    %v2333 = vadd.f32 %v2325, %v2331
    %v2334 = vadd.f32 %v2329, %v2289
    %v2335 = vadd.f32 %v2333, %v2305
    %2337 = vrot.lane.b32.xlu0 %v2289, 96
    %v2338 = vpop.permute.xlu0 %2337
    %v2340 = vadd.f32 %v2334, %v2338
    %2342 = vrot.lane.b32.xlu0 %v2305, 96
    %v2343 = vpop.permute.xlu0 %2342
    %v2345 = vadd.f32 %v2335, %v2343
    %2346 = vrot.lane.b32.xlu0 %v2289, 64
    %v2347 = vpop.permute.xlu0 %2346
    %v2349 = vadd.f32 %v2340, %v2347
    %2350 = vrot.lane.b32.xlu0 %v2305, 64
    %v2351 = vpop.permute.xlu0 %2350
    %v2353 = vadd.f32 %v2345, %v2351
    %2354 = vrot.lane.b32.xlu0 %v2289, 32
    %v2355 = vpop.permute.xlu0 %2354
    %v2357 = vadd.f32 %v2349, %v2355
    %2358 = vrot.lane.b32.xlu0 %v2305, 32
    %v2359 = vpop.permute.xlu0 %2358
    %v2361 = vadd.f32 %v2353, %v2359
    %v2362 = vmul.f32 %v2357, 0.0078125
    %v2363 = vmul.f32 %v2361, 0.0078125
    %v2364 = vmul.f32 %v2362, %v2362
    %v2365 = vsub.f32 %v2363, %v2364
    %v2366 = vmax.f32 %v2365, 0.0
    %v2367 = vadd.f32 %v2366, 1e-05
    %v2368 = vrsqrt.pop %v2367
    %v2369 = vmul.f32 %v2368, %v2367
    %v2370 = vmul.f32 %v2369, %v2368
    %v2371 = vmul.f32 0.5, %v2370
    %v2372 = vsub.f32 1.5, %v2371
    %v2373 = vmul.f32 %v2368, %v2372
    %vm2374 = vweird.f32 %v2367
    %vm2375 = vweird.f32 %v2368
    %vm2376 = vmor %vm2374, %vm2375
    %v2377 = vsel %vm2376, %v2368, %v2373
    %v2378 = vmul.f32 %v2244, %v2377
    %v2379 = vmul.f32 %v2362, %v2378
    %v2380 = vsub.f32 %v2245, %v2379
    %v2382 = vperm.slane %v2378, 0
    %2383 = vrot.lane.b32.xlu0 %v2382, 32
    %v2384 = vpop.permute.xlu0 %2383
    %2386 = vrot.lane.b32.xlu0 %v2382, 64
    %v2387 = vpop.permute.xlu0 %2386
    %2389 = vrot.lane.b32.xlu0 %v2382, 96
    %v2390 = vpop.permute.xlu0 %2389
    %v2392 = vsel %vm454, %v2378, %v2384
    %v2393 = vsel %vm458, %v2392, %v2387
    %v2394 = vsel %vm462, %v2393, %v2390
    %v2396 = vperm.slane %v2380, 0
    %2397 = vrot.lane.b32.xlu0 %v2396, 32
    %v2398 = vpop.permute.xlu0 %2397
    %2400 = vrot.lane.b32.xlu0 %v2396, 64
    %v2401 = vpop.permute.xlu0 %2400
    %2403 = vrot.lane.b32.xlu0 %v2396, 96
    %v2404 = vpop.permute.xlu0 %2403
    %v2406 = vsel %vm454, %v2380, %v2398
    %v2407 = vsel %vm458, %v2406, %v2401
    %v2408 = vsel %vm462, %v2407, %v2404
    %v2409 = vperm.slane %v2394, 0
    %v2410 = vmul.f32 %v1839, %v2409
    %v2411 = vmul.f32 %v1969, %v2409
    %v2412 = vperm.slane %v2408, 0
    %v2413 = vadd.f32 %v2410, %v2412
    %v2414 = vadd.f32 %v2411, %v2412
    %v2415 = vmax.f32 %v2413, 0.0
    %v2416 = vmax.f32 %v2414, 0.0
    %v2417 = vmax.f32 %v2415, %v2416
    %v2418 = vmul.f32 %v2111, %v2409
    %v2419 = vmul.f32 %v2241, %v2409
    %v2420 = vadd.f32 %v2418, %v2412
    %v2421 = vadd.f32 %v2419, %v2412
    %v2422 = vmax.f32 %v2420, 0.0
    %v2423 = vmax.f32 %v2421, 0.0
    %v2424 = vmax.f32 %v2422, %v2423
    %v2425 = vmax.f32 %v2417, %v2424
    %v2426 = vadd.f32 %v2425, 0.0
    %2428 = vrot.lane.b32.xlu0 %v2425, 96
    %v2429 = vpop.permute.xlu0 %2428
    %v2431 = vadd.f32 %v2426, %v2429
    %2432 = vrot.lane.b32.xlu0 %v2425, 64
    %v2433 = vpop.permute.xlu0 %2432
    %v2435 = vadd.f32 %v2431, %v2433
    %2436 = vrot.lane.b32.xlu0 %v2425, 32
    %v2437 = vpop.permute.xlu0 %2436
    %v2439 = vadd.f32 %v2435, %v2437
    %vm2440 = vcmask 257024
    %v2441 = vsel %vm2440, %v2439, 0.0
    %v2442 = vrot.slane %v2441, 4
    %v2443 = vadd.f32 %v2441, %v2442
    %v2444 = vrot.slane %v2443, 2
    %v2445 = vadd.f32 %v2443, %v2444
    %v2446 = vrot.slane %v2445, 1
    %v2447 = vadd.f32 %v2445, %v2446
    %v2449 = vrot.slane %v2439, 4
    %v2451 = vsel %vm2440, %v2449, 0.0
    %v2452 = vrot.slane %v2451, 4
    %v2453 = vadd.f32 %v2451, %v2452
    %v2454 = vrot.slane %v2453, 2
    %v2455 = vadd.f32 %v2453, %v2454
    %v2456 = vrot.slane %v2455, 1
    %v2457 = vadd.f32 %v2455, %v2456
    %v2458 = vsel %vm659, %v2447, %v2457
    %v2459 = vmul.f32 %v2458, 0.0625
    %v2460 = vpack.c.bf16 %v2459, %v2459
    %v2461 = vld [vmem:[%s8] sm:$0xf]
    %v2462 = vld [vmem:[%s8 + $0x4] sm:$0xf]
    %v2463 = vld [vmem:[%s8 + $0x8] sm:$0xf]
    %v2464 = vld [vmem:[%s8 + $0xc] sm:$0xf]
    %v2465 = vld [vmem:[%s9] sm:$0x1]
    %v2467 = vperm.slane %v2465, 0
    %v2473 = vunpack.c.l.b16 %v2461
    %v2474 = vunpack.c.l.b16 %v2462
    %v2475 = vunpack.c.l.b16 %v2463
    %v2476 = vunpack.c.l.b16 %v2464
    %v2477 = vpack.c.b16 %v2474, %v2473
    %v2478 = vpack.c.b16 %v2476, %v2475
    %v2482 = vsel %vm454, %v2460, 0
    %2484 = vmatpush.bf16.msra.mxu0 0
    %2485 = vmatpush.bf16.msra.mxu0 0
    %2486 = vmatpush.bf16.msra.mxu0 0
    %2487 = vmatpush.bf16.msra.mxu0 0
    %2488 = vmatpush.bf16.msra.mxu0 0
    %2489 = vmatpush.bf16.msra.mxu0 0
    %2490 = vmatpush.bf16.msra.mxu0 %v2478
    %2491 = vmatpush.bf16.msra.mxu0 %v2477
    %2492 = vmatmul.bf16.gmra.mxu0 %v2482
    %v2493 = vpop.f32.mrf.mxu0
    %v2494 = vadd.f32 %v2467, %v2493
    %v2495 = vpop.f32.mrf.mxu0
    %2496 = vdwg.mxu0
    %vm2497 = vcmask 74752
    %2498 = vst.msk [vmem:[#allocation5] sm:$0x3] %vm2497, %v2494
    // Predicated region
    $region46: #{cnn_forward.1} parent=1 // pred_check
      _
    $region47: #{cnn_forward.1} parent=1 // pred_check_branch
      %2500 = sbr.rel (0) target = $region49
    $region48: #{cnn_forward.1} parent=1 // pred_region
      %2502 = vsyncadd [#allocation4], 0
      %s2504 = sshll.u32 [#allocation5], 4
      %s2505 = int_to_ptr.vmem [resolvable:$true] %s2504
      %s2506 = sshll.u32 %s10, 4
      %s2507 = int_to_ptr.hbm [resolvable:$true] %s2506
      %2509 = dma.vmem_to_hbm [thread:$0]  %s2505, 32, %s2507, [#allocation4]
    $region49: #{cnn_forward.1} parent=1 // pred_fallthru
      _
    // Predicated region
    $region50: #{cnn_forward.1} parent=1 // pred_check
      _
    $region51: #{cnn_forward.1} parent=1 // pred_check_branch
      %2511 = sbr.rel (0) target = $region53
    $region52: #{cnn_forward.1} parent=1 // pred_region
      %2513 = dma.done [#allocation4], 32
    $region53: #{cnn_forward.1} parent=1 // pred_fallthru
      _
    %2514 = vsyncpa [#allocation3], 1
    %2515 = vsyncpa [#allocation4], 1

</llo_original>
